<compile_context>
chip_gen: v6e
topology: v6e:2x2x1
jax: 0.10.0
libtpu: 0.0.40
codegen_flags: <defaults>
</compile_context>

<pallas_src>
import functools

import jax
import jax.numpy as jnp
from jax import lax
from jax.experimental import pallas as pl
from jax.experimental.pallas import tpu as pltpu


# ---------------------------------------------------------------------------
# Fused kernel: QKV projection + per-head attention + flat reshape + out-proj.
# One grid step per batch element.
# ---------------------------------------------------------------------------
def _fused_attn_kernel(q_ref, k_ref, v_ref,
                       wq_ref, wk_ref, wv_ref,
                       bq_ref, bk_ref, bv_ref,
                       wp_ref, bp_ref,
                       o_ref,
                       o_scr,
                       *, nheads):
    N = q_ref.shape[1]      # query length
    C = o_ref.shape[2]      # model dim

    xq = q_ref[0]           # (N,  C) bf16
    xk = k_ref[0]           # (Nk, C) bf16
    xv = v_ref[0]           # (Nk, C) bf16

    # --- per-head attention; head outputs stacked contiguously in VMEM ------
    for h in range(nheads):                              # small static unroll
        # Per-head projections: (N, C) @ (C, D). Scale is pre-folded into Wq/bq.
        qh = jnp.dot(xq, wq_ref[h], preferred_element_type=jnp.float32) + bq_ref[h]
        kh = jnp.dot(xk, wk_ref[h], preferred_element_type=jnp.float32) + bk_ref[h]
        vh = jnp.dot(xv, wv_ref[h], preferred_element_type=jnp.float32) + bv_ref[h]

        # q @ k^T without materializing the transpose (NT matmul).
        s = lax.dot_general(qh.astype(jnp.bfloat16), kh.astype(jnp.bfloat16),
                            (((1,), (1,)), ((), ())),
                            preferred_element_type=jnp.float32)     # (N, Nk)

        # Numerically-stable softmax; denominator via EUP reciprocal.
        s = s - jnp.max(s, axis=-1, keepdims=True)
        p = jnp.exp(s)
        p = p * pl.reciprocal(jnp.sum(p, axis=-1, keepdims=True), approx=True)

        # attn_drop is identity in eval mode.
        o_scr[h * N:(h + 1) * N, :] = jnp.dot(
            p.astype(jnp.bfloat16), vh.astype(jnp.bfloat16),
            preferred_element_type=jnp.float32)                     # (N, D)

    # --- output projection with the torch flat-reshape semantics ------------
    # x = reshape(O, (N, C));  y = x @ Wp + bp
    #   = sum_j O[j::H, :] @ Wp[j*D:(j+1)*D, :] + bp
    acc = jnp.zeros((N, C), jnp.float32)
    for j in range(nheads):
        xj = o_scr[pl.ds(j, N, stride=nheads), :]        # (N, D) strided sublane read
        acc = acc + jnp.dot(xj.astype(jnp.bfloat16), wp_ref[j],
                            preferred_element_type=jnp.float32)
    # proj_drop is identity in eval mode.
    o_ref[0] = acc + bp_ref[...]


def attention_forward(query, key, value, params, *, nheads):
    """Pallas implementation of the torch Attention.forward semantics."""
    B, N, C = query.shape
    Nk = key.shape[1]
    head_dim = C // nheads
    scale = head_dim ** (-0.5)

    bf16, f32 = jnp.bfloat16, jnp.float32

    def split_cols(w):          # (C, C) -> (H, C, D);  [h] = w[:, h*D:(h+1)*D]
        return w.reshape(C, nheads, head_dim).transpose(1, 0, 2)

    def split_bias(b):          # (1, C) -> (H, 1, D)
        return b.reshape(nheads, head_dim)[:, None, :]

    # Scale folded into Wq / bq (f32), then cast weights to bf16 for the MXU.
    wq3 = split_cols(params["wq"] * scale).astype(bf16)
    wk3 = split_cols(params["wk"]).astype(bf16)
    wv3 = split_cols(params["wv"]).astype(bf16)
    bq3 = split_bias(params["bq"] * scale).astype(f32)
    bk3 = split_bias(params["bk"]).astype(f32)
    bv3 = split_bias(params["bv"]).astype(f32)
    wp3 = params["wp"].reshape(nheads, head_dim, C).astype(bf16)  # [j] = wp[jD:(j+1)D,:]
    bp = params["bp"].astype(f32)

    qb, kb, vb = (t.astype(bf16) for t in (query, key, value))

    kernel = functools.partial(_fused_attn_kernel, nheads=nheads)

    w_spec = pl.BlockSpec((nheads, C, head_dim), lambda b: (0, 0, 0))
    b_spec = pl.BlockSpec((nheads, 1, head_dim), lambda b: (0, 0, 0))

    # Advisory cost hint for the XLA scheduler.
    flops = int(B * (2 * N * C * C + 4 * Nk * C * C + 4 * N * Nk * C + 2 * N * C * C))
    transcendentals = int(B * nheads * N * Nk)
    bytes_accessed = int(2 * (B * N * C + 2 * B * Nk * C)   # bf16 activations
                         + 2 * 4 * C * C                    # bf16 weights
                         + 4 * 4 * C                        # f32 biases
                         + 4 * B * N * C)                   # f32 output

    out = pl.pallas_call(
        kernel,
        out_shape=jax.ShapeDtypeStruct((B, N, C), jnp.float32),
        grid_spec=pltpu.PrefetchScalarGridSpec(
            num_scalar_prefetch=0,
            grid=(B,),
            in_specs=[
                pl.BlockSpec((1, N, C), lambda b: (b, 0, 0)),
                pl.BlockSpec((1, Nk, C), lambda b: (b, 0, 0)),
                pl.BlockSpec((1, Nk, C), lambda b: (b, 0, 0)),
                w_spec, w_spec, w_spec,
                b_spec, b_spec, b_spec,
                pl.BlockSpec((nheads, head_dim, C), lambda b: (0, 0, 0)),
                pl.BlockSpec((1, C), lambda b: (0, 0)),
            ],
            out_specs=pl.BlockSpec((1, N, C), lambda b: (b, 0, 0)),
            scratch_shapes=[pltpu.VMEM((nheads * N, head_dim), jnp.float32)],
        ),
        compiler_params=pltpu.CompilerParams(dimension_semantics=("parallel",)),
        cost_estimate=pl.CostEstimate(flops=flops, transcendentals=transcendentals,
                                      bytes_accessed=bytes_accessed),
    )(qb, kb, vb, wq3, wk3, wv3, bq3, bk3, bv3, wp3, bp)
    # TODO(synk): for large N / Nk / C, additionally tile N (extra parallel grid
    # axis) and Nk (flash-style online softmax) to bound VMEM on v7x.
    return out


# ---------------------------------------------------------------------------
# Pure-JAX f32 reference (mirrors the torch code exactly) for verification.
# ---------------------------------------------------------------------------
def attention_reference(query, key, value, params, *, nheads):
    B, N, C = query.shape
    head_dim = C // nheads
    scale = head_dim ** (-0.5)

    q = query @ params["wq"] + params["bq"]
    k = key @ params["wk"] + params["bk"]
    v = value @ params["wv"] + params["bv"]

    def split_heads(t):  # 'b n (h d) -> (b h) n d'
        Bn, Nn, _ = t.shape
        return t.reshape(Bn, Nn, nheads, head_dim).transpose(0, 2, 1, 3).reshape(
            Bn * nheads, Nn, head_dim)

    q, k, v = map(split_heads, (q, k, v))
    attn = (q @ jnp.swapaxes(k, 2, 1)) * scale
    attn = jax.nn.softmax(attn, axis=-1)
    x = (attn @ v).reshape(B, N, C)          # flat reshape, exactly as in torch
    x = x @ params["wp"] + params["bp"]
    return x


def init_params(key, dim):
    ks = jax.random.split(key, 8)
    def w(k):
        return jax.random.normal(k, (dim, dim), jnp.float32) * 0.05
    def b(k):
        return jax.random.normal(k, (1, dim), jnp.float32) * 0.01
    return {
        "wq": w(ks[0]), "bq": b(ks[1]),
        "wk": w(ks[2]), "bk": b(ks[3]),
        "wv": w(ks[4]), "bv": b(ks[5]),
        "wp": w(ks[6]), "bp": b(ks[7]),
    }


if __name__ == "__main__":
    B, N, C, NHEADS = 2, 8, 32, 4

    root = jax.random.PRNGKey(0)
    k_q, k_k, k_v, k_p = jax.random.split(root, 4)

    query = jax.random.normal(k_q, (B, N, C), jnp.float32)
    key = jax.random.normal(k_k, (B, N, C), jnp.float32)
    value = jax.random.normal(k_v, (B, N, C), jnp.float32)
    params = init_params(k_p, C)

    out = attention_forward(query, key, value, params, nheads=NHEADS)
    out = jax.block_until_ready(out)

    ref = attention_reference(query, key, value, params, nheads=NHEADS)
    assert out.shape == (B, N, C)
    # Tolerance reflects bf16 MXU inputs (f32 accumulation) vs the pure-f32 ref.
    assert jnp.allclose(out, ref, atol=2e-2, rtol=2e-2), "mismatch vs reference"

    print("KERNEL_OK")
</pallas_src>

<mosaic_0001>
module attributes {stable_mosaic.version = 11 : i64} {
  func.func @_fused_attn_kernel(%arg0: i32, %arg1: memref<1x8x32xbf16, #tpu.memory_space<vmem>>, %arg2: memref<1x8x32xbf16, #tpu.memory_space<vmem>>, %arg3: memref<1x8x32xbf16, #tpu.memory_space<vmem>>, %arg4: memref<4x32x8xbf16, #tpu.memory_space<vmem>>, %arg5: memref<4x32x8xbf16, #tpu.memory_space<vmem>>, %arg6: memref<4x32x8xbf16, #tpu.memory_space<vmem>>, %arg7: memref<4x1x8xf32, #tpu.memory_space<vmem>>, %arg8: memref<4x1x8xf32, #tpu.memory_space<vmem>>, %arg9: memref<4x1x8xf32, #tpu.memory_space<vmem>>, %arg10: memref<4x8x32xbf16, #tpu.memory_space<vmem>>, %arg11: memref<1x32xf32, #tpu.memory_space<vmem>>, %arg12: memref<1x8x32xf32, #tpu.memory_space<vmem>>, %arg13: memref<32x8xf32, #tpu.memory_space<vmem>>) attributes {dimension_semantics = [#tpu.dimension_semantics<parallel>], iteration_bounds = array<i64: 2>, scalar_prefetch = 0 : i64, scratch_operands = 1 : i64, tpu.core_type = #tpu.core_type<tc>, window_params = [{transform_indices = @transform_0, window_bounds = array<i64: 1, 8, 32>}, {transform_indices = @transform_1, window_bounds = array<i64: 1, 8, 32>}, {transform_indices = @transform_2, window_bounds = array<i64: 1, 8, 32>}, {pipeline_mode = #tpu.pipeline_mode<synchronous>, transform_indices = @transform_3, window_bounds = array<i64: 4, 32, 8>}, {pipeline_mode = #tpu.pipeline_mode<synchronous>, transform_indices = @transform_4, window_bounds = array<i64: 4, 32, 8>}, {pipeline_mode = #tpu.pipeline_mode<synchronous>, transform_indices = @transform_5, window_bounds = array<i64: 4, 32, 8>}, {pipeline_mode = #tpu.pipeline_mode<synchronous>, transform_indices = @transform_6, window_bounds = array<i64: 4, 1, 8>}, {pipeline_mode = #tpu.pipeline_mode<synchronous>, transform_indices = @transform_7, window_bounds = array<i64: 4, 1, 8>}, {pipeline_mode = #tpu.pipeline_mode<synchronous>, transform_indices = @transform_8, window_bounds = array<i64: 4, 1, 8>}, {pipeline_mode = #tpu.pipeline_mode<synchronous>, transform_indices = @transform_9, window_bounds = array<i64: 4, 8, 32>}, {pipeline_mode = #tpu.pipeline_mode<synchronous>, transform_indices = @transform_10, window_bounds = array<i64: 1, 32>}, {transform_indices = @transform_11, window_bounds = array<i64: 1, 8, 32>}]} {
    %c0 = arith.constant 0 : index
    %c0_0 = arith.constant 0 : index
    %c0_1 = arith.constant 0 : index
    %0 = vector.load %arg1[%c0, %c0_0, %c0_1] : memref<1x8x32xbf16, #tpu.memory_space<vmem>>, vector<1x8x32xbf16>
    %1 = vector.shape_cast %0 : vector<1x8x32xbf16> to vector<8x32xbf16>
    %c0_2 = arith.constant 0 : index
    %c0_3 = arith.constant 0 : index
    %c0_4 = arith.constant 0 : index
    %2 = vector.load %arg2[%c0_2, %c0_3, %c0_4] : memref<1x8x32xbf16, #tpu.memory_space<vmem>>, vector<1x8x32xbf16>
    %3 = vector.shape_cast %2 : vector<1x8x32xbf16> to vector<8x32xbf16>
    %c0_5 = arith.constant 0 : index
    %c0_6 = arith.constant 0 : index
    %c0_7 = arith.constant 0 : index
    %4 = vector.load %arg3[%c0_5, %c0_6, %c0_7] : memref<1x8x32xbf16, #tpu.memory_space<vmem>>, vector<1x8x32xbf16>
    %5 = vector.shape_cast %4 : vector<1x8x32xbf16> to vector<8x32xbf16>
    %c0_8 = arith.constant 0 : index
    %c0_9 = arith.constant 0 : index
    %c0_10 = arith.constant 0 : index
    %6 = vector.load %arg4[%c0_8, %c0_9, %c0_10] : memref<4x32x8xbf16, #tpu.memory_space<vmem>>, vector<1x32x8xbf16>
    %7 = vector.shape_cast %6 : vector<1x32x8xbf16> to vector<32x8xbf16>
    %cst = arith.constant dense<0.000000e+00> : vector<8x8xf32>
    %8 = tpu.matmul %1, %7, %cst {dimension_numbers = #tpu.dot_dimension_numbers<[1], [0], [0], [1], [0, 0, 1, 1], [], []>} : vector<8x32xbf16>, vector<32x8xbf16>, vector<8x8xf32> -> vector<8x8xf32>
    %c0_11 = arith.constant 0 : index
    %c0_12 = arith.constant 0 : index
    %c0_13 = arith.constant 0 : index
    %9 = vector.load %arg7[%c0_11, %c0_12, %c0_13] : memref<4x1x8xf32, #tpu.memory_space<vmem>>, vector<1x1x8xf32>
    %10 = vector.shape_cast %9 : vector<1x1x8xf32> to vector<1x8xf32>
    %11 = vector.broadcast %10 : vector<1x8xf32> to vector<8x8xf32>
    %12 = arith.addf %8, %11 : vector<8x8xf32>
    %c0_14 = arith.constant 0 : index
    %c0_15 = arith.constant 0 : index
    %c0_16 = arith.constant 0 : index
    %13 = vector.load %arg5[%c0_14, %c0_15, %c0_16] : memref<4x32x8xbf16, #tpu.memory_space<vmem>>, vector<1x32x8xbf16>
    %14 = vector.shape_cast %13 : vector<1x32x8xbf16> to vector<32x8xbf16>
    %cst_17 = arith.constant dense<0.000000e+00> : vector<8x8xf32>
    %15 = tpu.matmul %3, %14, %cst_17 {dimension_numbers = #tpu.dot_dimension_numbers<[1], [0], [0], [1], [0, 0, 1, 1], [], []>} : vector<8x32xbf16>, vector<32x8xbf16>, vector<8x8xf32> -> vector<8x8xf32>
    %c0_18 = arith.constant 0 : index
    %c0_19 = arith.constant 0 : index
    %c0_20 = arith.constant 0 : index
    %16 = vector.load %arg8[%c0_18, %c0_19, %c0_20] : memref<4x1x8xf32, #tpu.memory_space<vmem>>, vector<1x1x8xf32>
    %17 = vector.shape_cast %16 : vector<1x1x8xf32> to vector<1x8xf32>
    %18 = vector.broadcast %17 : vector<1x8xf32> to vector<8x8xf32>
    %19 = arith.addf %15, %18 : vector<8x8xf32>
    %c0_21 = arith.constant 0 : index
    %c0_22 = arith.constant 0 : index
    %c0_23 = arith.constant 0 : index
    %20 = vector.load %arg6[%c0_21, %c0_22, %c0_23] : memref<4x32x8xbf16, #tpu.memory_space<vmem>>, vector<1x32x8xbf16>
    %21 = vector.shape_cast %20 : vector<1x32x8xbf16> to vector<32x8xbf16>
    %cst_24 = arith.constant dense<0.000000e+00> : vector<8x8xf32>
    %22 = tpu.matmul %5, %21, %cst_24 {dimension_numbers = #tpu.dot_dimension_numbers<[1], [0], [0], [1], [0, 0, 1, 1], [], []>} : vector<8x32xbf16>, vector<32x8xbf16>, vector<8x8xf32> -> vector<8x8xf32>
    %c0_25 = arith.constant 0 : index
    %c0_26 = arith.constant 0 : index
    %c0_27 = arith.constant 0 : index
    %23 = vector.load %arg9[%c0_25, %c0_26, %c0_27] : memref<4x1x8xf32, #tpu.memory_space<vmem>>, vector<1x1x8xf32>
    %24 = vector.shape_cast %23 : vector<1x1x8xf32> to vector<1x8xf32>
    %25 = vector.broadcast %24 : vector<1x8xf32> to vector<8x8xf32>
    %26 = arith.addf %22, %25 : vector<8x8xf32>
    %27 = arith.truncf %12 : vector<8x8xf32> to vector<8x8xbf16>
    %28 = arith.truncf %19 : vector<8x8xf32> to vector<8x8xbf16>
    %cst_28 = arith.constant dense<0.000000e+00> : vector<8x8xf32>
    %29 = tpu.matmul %27, %28, %cst_28 {dimension_numbers = #tpu.dot_dimension_numbers<[1], [1], [0], [0], [0, 0, 1, 0], [], []>} : vector<8x8xbf16>, vector<8x8xbf16>, vector<8x8xf32> -> vector<8x8xf32>
    %cst_29 = arith.constant dense<0xFF800000> : vector<8xf32>
    %30 = vector.multi_reduction <maximumf>, %29, %cst_29 [1] : vector<8x8xf32> to vector<8xf32>
    %31 = vector.shape_cast %30 : vector<8xf32> to vector<8x1xf32>
    %32 = vector.broadcast %31 : vector<8x1xf32> to vector<8x8xf32>
    %33 = arith.subf %29, %32 : vector<8x8xf32>
    %34 = math.exp %33 : vector<8x8xf32>
    %cst_30 = arith.constant dense<0.000000e+00> : vector<8xf32>
    %35 = vector.multi_reduction <add>, %34, %cst_30 [1] : vector<8x8xf32> to vector<8xf32>
    %36 = vector.shape_cast %35 : vector<8xf32> to vector<8x1xf32>
    %37 = tpu.reciprocal %36 {approx = true} : vector<8x1xf32> -> vector<8x1xf32>
    %38 = vector.broadcast %37 : vector<8x1xf32> to vector<8x8xf32>
    %39 = arith.mulf %34, %38 : vector<8x8xf32>
    %40 = arith.truncf %39 : vector<8x8xf32> to vector<8x8xbf16>
    %41 = arith.truncf %26 : vector<8x8xf32> to vector<8x8xbf16>
    %cst_31 = arith.constant dense<0.000000e+00> : vector<8x8xf32>
    %42 = tpu.matmul %40, %41, %cst_31 {dimension_numbers = #tpu.dot_dimension_numbers<[1], [0], [0], [1], [0, 0, 1, 1], [], []>} : vector<8x8xbf16>, vector<8x8xbf16>, vector<8x8xf32> -> vector<8x8xf32>
    %c0_32 = arith.constant 0 : index
    %c0_33 = arith.constant 0 : index
    %43 = vector.load %arg13[%c0_32, %c0_33] : memref<32x8xf32, #tpu.memory_space<vmem>>, vector<8x8xf32>
    tpu.vector_store %arg13[%c0_32, %c0_33], %42 {strides = array<i32>} : memref<32x8xf32, #tpu.memory_space<vmem>>, vector<8x8xf32>,
    %c1 = arith.constant 1 : index
    %c0_34 = arith.constant 0 : index
    %c0_35 = arith.constant 0 : index
    %44 = vector.load %arg4[%c1, %c0_34, %c0_35] : memref<4x32x8xbf16, #tpu.memory_space<vmem>>, vector<1x32x8xbf16>
    %45 = vector.shape_cast %44 : vector<1x32x8xbf16> to vector<32x8xbf16>
    %cst_36 = arith.constant dense<0.000000e+00> : vector<8x8xf32>
    %46 = tpu.matmul %1, %45, %cst_36 {dimension_numbers = #tpu.dot_dimension_numbers<[1], [0], [0], [1], [0, 0, 1, 1], [], []>} : vector<8x32xbf16>, vector<32x8xbf16>, vector<8x8xf32> -> vector<8x8xf32>
    %c1_37 = arith.constant 1 : index
    %c0_38 = arith.constant 0 : index
    %c0_39 = arith.constant 0 : index
    %47 = vector.load %arg7[%c1_37, %c0_38, %c0_39] : memref<4x1x8xf32, #tpu.memory_space<vmem>>, vector<1x1x8xf32>
    %48 = vector.shape_cast %47 : vector<1x1x8xf32> to vector<1x8xf32>
    %49 = vector.broadcast %48 : vector<1x8xf32> to vector<8x8xf32>
    %50 = arith.addf %46, %49 : vector<8x8xf32>
    %c1_40 = arith.constant 1 : index
    %c0_41 = arith.constant 0 : index
    %c0_42 = arith.constant 0 : index
    %51 = vector.load %arg5[%c1_40, %c0_41, %c0_42] : memref<4x32x8xbf16, #tpu.memory_space<vmem>>, vector<1x32x8xbf16>
    %52 = vector.shape_cast %51 : vector<1x32x8xbf16> to vector<32x8xbf16>
    %cst_43 = arith.constant dense<0.000000e+00> : vector<8x8xf32>
    %53 = tpu.matmul %3, %52, %cst_43 {dimension_numbers = #tpu.dot_dimension_numbers<[1], [0], [0], [1], [0, 0, 1, 1], [], []>} : vector<8x32xbf16>, vector<32x8xbf16>, vector<8x8xf32> -> vector<8x8xf32>
    %c1_44 = arith.constant 1 : index
    %c0_45 = arith.constant 0 : index
    %c0_46 = arith.constant 0 : index
    %54 = vector.load %arg8[%c1_44, %c0_45, %c0_46] : memref<4x1x8xf32, #tpu.memory_space<vmem>>, vector<1x1x8xf32>
    %55 = vector.shape_cast %54 : vector<1x1x8xf32> to vector<1x8xf32>
    %56 = vector.broadcast %55 : vector<1x8xf32> to vector<8x8xf32>
    %57 = arith.addf %53, %56 : vector<8x8xf32>
    %c1_47 = arith.constant 1 : index
    %c0_48 = arith.constant 0 : index
    %c0_49 = arith.constant 0 : index
    %58 = vector.load %arg6[%c1_47, %c0_48, %c0_49] : memref<4x32x8xbf16, #tpu.memory_space<vmem>>, vector<1x32x8xbf16>
    %59 = vector.shape_cast %58 : vector<1x32x8xbf16> to vector<32x8xbf16>
    %cst_50 = arith.constant dense<0.000000e+00> : vector<8x8xf32>
    %60 = tpu.matmul %5, %59, %cst_50 {dimension_numbers = #tpu.dot_dimension_numbers<[1], [0], [0], [1], [0, 0, 1, 1], [], []>} : vector<8x32xbf16>, vector<32x8xbf16>, vector<8x8xf32> -> vector<8x8xf32>
    %c1_51 = arith.constant 1 : index
    %c0_52 = arith.constant 0 : index
    %c0_53 = arith.constant 0 : index
    %61 = vector.load %arg9[%c1_51, %c0_52, %c0_53] : memref<4x1x8xf32, #tpu.memory_space<vmem>>, vector<1x1x8xf32>
    %62 = vector.shape_cast %61 : vector<1x1x8xf32> to vector<1x8xf32>
    %63 = vector.broadcast %62 : vector<1x8xf32> to vector<8x8xf32>
    %64 = arith.addf %60, %63 : vector<8x8xf32>
    %65 = arith.truncf %50 : vector<8x8xf32> to vector<8x8xbf16>
    %66 = arith.truncf %57 : vector<8x8xf32> to vector<8x8xbf16>
    %cst_54 = arith.constant dense<0.000000e+00> : vector<8x8xf32>
    %67 = tpu.matmul %65, %66, %cst_54 {dimension_numbers = #tpu.dot_dimension_numbers<[1], [1], [0], [0], [0, 0, 1, 0], [], []>} : vector<8x8xbf16>, vector<8x8xbf16>, vector<8x8xf32> -> vector<8x8xf32>
    %cst_55 = arith.constant dense<0xFF800000> : vector<8xf32>
    %68 = vector.multi_reduction <maximumf>, %67, %cst_55 [1] : vector<8x8xf32> to vector<8xf32>
    %69 = vector.shape_cast %68 : vector<8xf32> to vector<8x1xf32>
    %70 = vector.broadcast %69 : vector<8x1xf32> to vector<8x8xf32>
    %71 = arith.subf %67, %70 : vector<8x8xf32>
    %72 = math.exp %71 : vector<8x8xf32>
    %cst_56 = arith.constant dense<0.000000e+00> : vector<8xf32>
    %73 = vector.multi_reduction <add>, %72, %cst_56 [1] : vector<8x8xf32> to vector<8xf32>
    %74 = vector.shape_cast %73 : vector<8xf32> to vector<8x1xf32>
    %75 = tpu.reciprocal %74 {approx = true} : vector<8x1xf32> -> vector<8x1xf32>
    %76 = vector.broadcast %75 : vector<8x1xf32> to vector<8x8xf32>
    %77 = arith.mulf %72, %76 : vector<8x8xf32>
    %78 = arith.truncf %77 : vector<8x8xf32> to vector<8x8xbf16>
    %79 = arith.truncf %64 : vector<8x8xf32> to vector<8x8xbf16>
    %cst_57 = arith.constant dense<0.000000e+00> : vector<8x8xf32>
    %80 = tpu.matmul %78, %79, %cst_57 {dimension_numbers = #tpu.dot_dimension_numbers<[1], [0], [0], [1], [0, 0, 1, 1], [], []>} : vector<8x8xbf16>, vector<8x8xbf16>, vector<8x8xf32> -> vector<8x8xf32>
    %c8 = arith.constant 8 : index
    %c0_58 = arith.constant 0 : index
    %81 = vector.load %arg13[%c8, %c0_58] : memref<32x8xf32, #tpu.memory_space<vmem>>, vector<8x8xf32>
    tpu.vector_store %arg13[%c8, %c0_58], %80 {strides = array<i32>} : memref<32x8xf32, #tpu.memory_space<vmem>>, vector<8x8xf32>,
    %c2 = arith.constant 2 : index
    %c0_59 = arith.constant 0 : index
    %c0_60 = arith.constant 0 : index
    %82 = vector.load %arg4[%c2, %c0_59, %c0_60] : memref<4x32x8xbf16, #tpu.memory_space<vmem>>, vector<1x32x8xbf16>
    %83 = vector.shape_cast %82 : vector<1x32x8xbf16> to vector<32x8xbf16>
    %cst_61 = arith.constant dense<0.000000e+00> : vector<8x8xf32>
    %84 = tpu.matmul %1, %83, %cst_61 {dimension_numbers = #tpu.dot_dimension_numbers<[1], [0], [0], [1], [0, 0, 1, 1], [], []>} : vector<8x32xbf16>, vector<32x8xbf16>, vector<8x8xf32> -> vector<8x8xf32>
    %c2_62 = arith.constant 2 : index
    %c0_63 = arith.constant 0 : index
    %c0_64 = arith.constant 0 : index
    %85 = vector.load %arg7[%c2_62, %c0_63, %c0_64] : memref<4x1x8xf32, #tpu.memory_space<vmem>>, vector<1x1x8xf32>
    %86 = vector.shape_cast %85 : vector<1x1x8xf32> to vector<1x8xf32>
    %87 = vector.broadcast %86 : vector<1x8xf32> to vector<8x8xf32>
    %88 = arith.addf %84, %87 : vector<8x8xf32>
    %c2_65 = arith.constant 2 : index
    %c0_66 = arith.constant 0 : index
    %c0_67 = arith.constant 0 : index
    %89 = vector.load %arg5[%c2_65, %c0_66, %c0_67] : memref<4x32x8xbf16, #tpu.memory_space<vmem>>, vector<1x32x8xbf16>
    %90 = vector.shape_cast %89 : vector<1x32x8xbf16> to vector<32x8xbf16>
    %cst_68 = arith.constant dense<0.000000e+00> : vector<8x8xf32>
    %91 = tpu.matmul %3, %90, %cst_68 {dimension_numbers = #tpu.dot_dimension_numbers<[1], [0], [0], [1], [0, 0, 1, 1], [], []>} : vector<8x32xbf16>, vector<32x8xbf16>, vector<8x8xf32> -> vector<8x8xf32>
    %c2_69 = arith.constant 2 : index
    %c0_70 = arith.constant 0 : index
    %c0_71 = arith.constant 0 : index
    %92 = vector.load %arg8[%c2_69, %c0_70, %c0_71] : memref<4x1x8xf32, #tpu.memory_space<vmem>>, vector<1x1x8xf32>
    %93 = vector.shape_cast %92 : vector<1x1x8xf32> to vector<1x8xf32>
    %94 = vector.broadcast %93 : vector<1x8xf32> to vector<8x8xf32>
    %95 = arith.addf %91, %94 : vector<8x8xf32>
    %c2_72 = arith.constant 2 : index
    %c0_73 = arith.constant 0 : index
    %c0_74 = arith.constant 0 : index
    %96 = vector.load %arg6[%c2_72, %c0_73, %c0_74] : memref<4x32x8xbf16, #tpu.memory_space<vmem>>, vector<1x32x8xbf16>
    %97 = vector.shape_cast %96 : vector<1x32x8xbf16> to vector<32x8xbf16>
    %cst_75 = arith.constant dense<0.000000e+00> : vector<8x8xf32>
    %98 = tpu.matmul %5, %97, %cst_75 {dimension_numbers = #tpu.dot_dimension_numbers<[1], [0], [0], [1], [0, 0, 1, 1], [], []>} : vector<8x32xbf16>, vector<32x8xbf16>, vector<8x8xf32> -> vector<8x8xf32>
    %c2_76 = arith.constant 2 : index
    %c0_77 = arith.constant 0 : index
    %c0_78 = arith.constant 0 : index
    %99 = vector.load %arg9[%c2_76, %c0_77, %c0_78] : memref<4x1x8xf32, #tpu.memory_space<vmem>>, vector<1x1x8xf32>
    %100 = vector.shape_cast %99 : vector<1x1x8xf32> to vector<1x8xf32>
    %101 = vector.broadcast %100 : vector<1x8xf32> to vector<8x8xf32>
    %102 = arith.addf %98, %101 : vector<8x8xf32>
    %103 = arith.truncf %88 : vector<8x8xf32> to vector<8x8xbf16>
    %104 = arith.truncf %95 : vector<8x8xf32> to vector<8x8xbf16>
    %cst_79 = arith.constant dense<0.000000e+00> : vector<8x8xf32>
    %105 = tpu.matmul %103, %104, %cst_79 {dimension_numbers = #tpu.dot_dimension_numbers<[1], [1], [0], [0], [0, 0, 1, 0], [], []>} : vector<8x8xbf16>, vector<8x8xbf16>, vector<8x8xf32> -> vector<8x8xf32>
    %cst_80 = arith.constant dense<0xFF800000> : vector<8xf32>
    %106 = vector.multi_reduction <maximumf>, %105, %cst_80 [1] : vector<8x8xf32> to vector<8xf32>
    %107 = vector.shape_cast %106 : vector<8xf32> to vector<8x1xf32>
    %108 = vector.broadcast %107 : vector<8x1xf32> to vector<8x8xf32>
    %109 = arith.subf %105, %108 : vector<8x8xf32>
    %110 = math.exp %109 : vector<8x8xf32>
    %cst_81 = arith.constant dense<0.000000e+00> : vector<8xf32>
    %111 = vector.multi_reduction <add>, %110, %cst_81 [1] : vector<8x8xf32> to vector<8xf32>
    %112 = vector.shape_cast %111 : vector<8xf32> to vector<8x1xf32>
    %113 = tpu.reciprocal %112 {approx = true} : vector<8x1xf32> -> vector<8x1xf32>
    %114 = vector.broadcast %113 : vector<8x1xf32> to vector<8x8xf32>
    %115 = arith.mulf %110, %114 : vector<8x8xf32>
    %116 = arith.truncf %115 : vector<8x8xf32> to vector<8x8xbf16>
    %117 = arith.truncf %102 : vector<8x8xf32> to vector<8x8xbf16>
    %cst_82 = arith.constant dense<0.000000e+00> : vector<8x8xf32>
    %118 = tpu.matmul %116, %117, %cst_82 {dimension_numbers = #tpu.dot_dimension_numbers<[1], [0], [0], [1], [0, 0, 1, 1], [], []>} : vector<8x8xbf16>, vector<8x8xbf16>, vector<8x8xf32> -> vector<8x8xf32>
    %c16 = arith.constant 16 : index
    %c0_83 = arith.constant 0 : index
    %119 = vector.load %arg13[%c16, %c0_83] : memref<32x8xf32, #tpu.memory_space<vmem>>, vector<8x8xf32>
    tpu.vector_store %arg13[%c16, %c0_83], %118 {strides = array<i32>} : memref<32x8xf32, #tpu.memory_space<vmem>>, vector<8x8xf32>,
    %c3 = arith.constant 3 : index
    %c0_84 = arith.constant 0 : index
    %c0_85 = arith.constant 0 : index
    %120 = vector.load %arg4[%c3, %c0_84, %c0_85] : memref<4x32x8xbf16, #tpu.memory_space<vmem>>, vector<1x32x8xbf16>
    %121 = vector.shape_cast %120 : vector<1x32x8xbf16> to vector<32x8xbf16>
    %cst_86 = arith.constant dense<0.000000e+00> : vector<8x8xf32>
    %122 = tpu.matmul %1, %121, %cst_86 {dimension_numbers = #tpu.dot_dimension_numbers<[1], [0], [0], [1], [0, 0, 1, 1], [], []>} : vector<8x32xbf16>, vector<32x8xbf16>, vector<8x8xf32> -> vector<8x8xf32>
    %c3_87 = arith.constant 3 : index
    %c0_88 = arith.constant 0 : index
    %c0_89 = arith.constant 0 : index
    %123 = vector.load %arg7[%c3_87, %c0_88, %c0_89] : memref<4x1x8xf32, #tpu.memory_space<vmem>>, vector<1x1x8xf32>
    %124 = vector.shape_cast %123 : vector<1x1x8xf32> to vector<1x8xf32>
    %125 = vector.broadcast %124 : vector<1x8xf32> to vector<8x8xf32>
    %126 = arith.addf %122, %125 : vector<8x8xf32>
    %c3_90 = arith.constant 3 : index
    %c0_91 = arith.constant 0 : index
    %c0_92 = arith.constant 0 : index
    %127 = vector.load %arg5[%c3_90, %c0_91, %c0_92] : memref<4x32x8xbf16, #tpu.memory_space<vmem>>, vector<1x32x8xbf16>
    %128 = vector.shape_cast %127 : vector<1x32x8xbf16> to vector<32x8xbf16>
    %cst_93 = arith.constant dense<0.000000e+00> : vector<8x8xf32>
    %129 = tpu.matmul %3, %128, %cst_93 {dimension_numbers = #tpu.dot_dimension_numbers<[1], [0], [0], [1], [0, 0, 1, 1], [], []>} : vector<8x32xbf16>, vector<32x8xbf16>, vector<8x8xf32> -> vector<8x8xf32>
    %c3_94 = arith.constant 3 : index
    %c0_95 = arith.constant 0 : index
    %c0_96 = arith.constant 0 : index
    %130 = vector.load %arg8[%c3_94, %c0_95, %c0_96] : memref<4x1x8xf32, #tpu.memory_space<vmem>>, vector<1x1x8xf32>
    %131 = vector.shape_cast %130 : vector<1x1x8xf32> to vector<1x8xf32>
    %132 = vector.broadcast %131 : vector<1x8xf32> to vector<8x8xf32>
    %133 = arith.addf %129, %132 : vector<8x8xf32>
    %c3_97 = arith.constant 3 : index
    %c0_98 = arith.constant 0 : index
    %c0_99 = arith.constant 0 : index
    %134 = vector.load %arg6[%c3_97, %c0_98, %c0_99] : memref<4x32x8xbf16, #tpu.memory_space<vmem>>, vector<1x32x8xbf16>
    %135 = vector.shape_cast %134 : vector<1x32x8xbf16> to vector<32x8xbf16>
    %cst_100 = arith.constant dense<0.000000e+00> : vector<8x8xf32>
    %136 = tpu.matmul %5, %135, %cst_100 {dimension_numbers = #tpu.dot_dimension_numbers<[1], [0], [0], [1], [0, 0, 1, 1], [], []>} : vector<8x32xbf16>, vector<32x8xbf16>, vector<8x8xf32> -> vector<8x8xf32>
    %c3_101 = arith.constant 3 : index
    %c0_102 = arith.constant 0 : index
    %c0_103 = arith.constant 0 : index
    %137 = vector.load %arg9[%c3_101, %c0_102, %c0_103] : memref<4x1x8xf32, #tpu.memory_space<vmem>>, vector<1x1x8xf32>
    %138 = vector.shape_cast %137 : vector<1x1x8xf32> to vector<1x8xf32>
    %139 = vector.broadcast %138 : vector<1x8xf32> to vector<8x8xf32>
    %140 = arith.addf %136, %139 : vector<8x8xf32>
    %141 = arith.truncf %126 : vector<8x8xf32> to vector<8x8xbf16>
    %142 = arith.truncf %133 : vector<8x8xf32> to vector<8x8xbf16>
    %cst_104 = arith.constant dense<0.000000e+00> : vector<8x8xf32>
    %143 = tpu.matmul %141, %142, %cst_104 {dimension_numbers = #tpu.dot_dimension_numbers<[1], [1], [0], [0], [0, 0, 1, 0], [], []>} : vector<8x8xbf16>, vector<8x8xbf16>, vector<8x8xf32> -> vector<8x8xf32>
    %cst_105 = arith.constant dense<0xFF800000> : vector<8xf32>
    %144 = vector.multi_reduction <maximumf>, %143, %cst_105 [1] : vector<8x8xf32> to vector<8xf32>
    %145 = vector.shape_cast %144 : vector<8xf32> to vector<8x1xf32>
    %146 = vector.broadcast %145 : vector<8x1xf32> to vector<8x8xf32>
    %147 = arith.subf %143, %146 : vector<8x8xf32>
    %148 = math.exp %147 : vector<8x8xf32>
    %cst_106 = arith.constant dense<0.000000e+00> : vector<8xf32>
    %149 = vector.multi_reduction <add>, %148, %cst_106 [1] : vector<8x8xf32> to vector<8xf32>
    %150 = vector.shape_cast %149 : vector<8xf32> to vector<8x1xf32>
    %151 = tpu.reciprocal %150 {approx = true} : vector<8x1xf32> -> vector<8x1xf32>
    %152 = vector.broadcast %151 : vector<8x1xf32> to vector<8x8xf32>
    %153 = arith.mulf %148, %152 : vector<8x8xf32>
    %154 = arith.truncf %153 : vector<8x8xf32> to vector<8x8xbf16>
    %155 = arith.truncf %140 : vector<8x8xf32> to vector<8x8xbf16>
    %cst_107 = arith.constant dense<0.000000e+00> : vector<8x8xf32>
    %156 = tpu.matmul %154, %155, %cst_107 {dimension_numbers = #tpu.dot_dimension_numbers<[1], [0], [0], [1], [0, 0, 1, 1], [], []>} : vector<8x8xbf16>, vector<8x8xbf16>, vector<8x8xf32> -> vector<8x8xf32>
    %c24 = arith.constant 24 : index
    %c0_108 = arith.constant 0 : index
    %157 = vector.load %arg13[%c24, %c0_108] : memref<32x8xf32, #tpu.memory_space<vmem>>, vector<8x8xf32>
    tpu.vector_store %arg13[%c24, %c0_108], %156 {strides = array<i32>} : memref<32x8xf32, #tpu.memory_space<vmem>>, vector<8x8xf32>,
    %cst_109 = arith.constant 0.000000e+00 : f32
    %158 = vector.broadcast %cst_109 : f32 to vector<8x32xf32>
    %c0_110 = arith.constant 0 : index
    %c0_111 = arith.constant 0 : index
    %159 = tpu.strided_load %arg13[%c0_110, %c0_111] {strides = array<i32: 4, 1>} : memref<32x8xf32, #tpu.memory_space<vmem>>, vector<8x8xf32>
    %160 = arith.truncf %159 : vector<8x8xf32> to vector<8x8xbf16>
    %c0_112 = arith.constant 0 : index
    %c0_113 = arith.constant 0 : index
    %c0_114 = arith.constant 0 : index
    %161 = vector.load %arg10[%c0_112, %c0_113, %c0_114] : memref<4x8x32xbf16, #tpu.memory_space<vmem>>, vector<1x8x32xbf16>
    %162 = vector.shape_cast %161 : vector<1x8x32xbf16> to vector<8x32xbf16>
    %cst_115 = arith.constant dense<0.000000e+00> : vector<8x32xf32>
    %163 = tpu.matmul %160, %162, %cst_115 {dimension_numbers = #tpu.dot_dimension_numbers<[1], [0], [0], [1], [0, 0, 1, 1], [], []>} : vector<8x8xbf16>, vector<8x32xbf16>, vector<8x32xf32> -> vector<8x32xf32>
    %164 = arith.addf %158, %163 : vector<8x32xf32>
    %c1_116 = arith.constant 1 : index
    %c0_117 = arith.constant 0 : index
    %165 = tpu.strided_load %arg13[%c1_116, %c0_117] {strides = array<i32: 4, 1>} : memref<32x8xf32, #tpu.memory_space<vmem>>, vector<8x8xf32>
    %166 = arith.truncf %165 : vector<8x8xf32> to vector<8x8xbf16>
    %c1_118 = arith.constant 1 : index
    %c0_119 = arith.constant 0 : index
    %c0_120 = arith.constant 0 : index
    %167 = vector.load %arg10[%c1_118, %c0_119, %c0_120] : memref<4x8x32xbf16, #tpu.memory_space<vmem>>, vector<1x8x32xbf16>
    %168 = vector.shape_cast %167 : vector<1x8x32xbf16> to vector<8x32xbf16>
    %cst_121 = arith.constant dense<0.000000e+00> : vector<8x32xf32>
    %169 = tpu.matmul %166, %168, %cst_121 {dimension_numbers = #tpu.dot_dimension_numbers<[1], [0], [0], [1], [0, 0, 1, 1], [], []>} : vector<8x8xbf16>, vector<8x32xbf16>, vector<8x32xf32> -> vector<8x32xf32>
    %170 = arith.addf %164, %169 : vector<8x32xf32>
    %c2_122 = arith.constant 2 : index
    %c0_123 = arith.constant 0 : index
    %171 = tpu.strided_load %arg13[%c2_122, %c0_123] {strides = array<i32: 4, 1>} : memref<32x8xf32, #tpu.memory_space<vmem>>, vector<8x8xf32>
    %172 = arith.truncf %171 : vector<8x8xf32> to vector<8x8xbf16>
    %c2_124 = arith.constant 2 : index
    %c0_125 = arith.constant 0 : index
    %c0_126 = arith.constant 0 : index
    %173 = vector.load %arg10[%c2_124, %c0_125, %c0_126] : memref<4x8x32xbf16, #tpu.memory_space<vmem>>, vector<1x8x32xbf16>
    %174 = vector.shape_cast %173 : vector<1x8x32xbf16> to vector<8x32xbf16>
    %cst_127 = arith.constant dense<0.000000e+00> : vector<8x32xf32>
    %175 = tpu.matmul %172, %174, %cst_127 {dimension_numbers = #tpu.dot_dimension_numbers<[1], [0], [0], [1], [0, 0, 1, 1], [], []>} : vector<8x8xbf16>, vector<8x32xbf16>, vector<8x32xf32> -> vector<8x32xf32>
    %176 = arith.addf %170, %175 : vector<8x32xf32>
    %c3_128 = arith.constant 3 : index
    %c0_129 = arith.constant 0 : index
    %177 = tpu.strided_load %arg13[%c3_128, %c0_129] {strides = array<i32: 4, 1>} : memref<32x8xf32, #tpu.memory_space<vmem>>, vector<8x8xf32>
    %178 = arith.truncf %177 : vector<8x8xf32> to vector<8x8xbf16>
    %c3_130 = arith.constant 3 : index
    %c0_131 = arith.constant 0 : index
    %c0_132 = arith.constant 0 : index
    %179 = vector.load %arg10[%c3_130, %c0_131, %c0_132] : memref<4x8x32xbf16, #tpu.memory_space<vmem>>, vector<1x8x32xbf16>
    %180 = vector.shape_cast %179 : vector<1x8x32xbf16> to vector<8x32xbf16>
    %cst_133 = arith.constant dense<0.000000e+00> : vector<8x32xf32>
    %181 = tpu.matmul %178, %180, %cst_133 {dimension_numbers = #tpu.dot_dimension_numbers<[1], [0], [0], [1], [0, 0, 1, 1], [], []>} : vector<8x8xbf16>, vector<8x32xbf16>, vector<8x32xf32> -> vector<8x32xf32>
    %182 = arith.addf %176, %181 : vector<8x32xf32>
    %c0_134 = arith.constant 0 : index
    %c0_135 = arith.constant 0 : index
    %183 = vector.load %arg11[%c0_134, %c0_135] : memref<1x32xf32, #tpu.memory_space<vmem>>, vector<1x32xf32>
    %184 = vector.broadcast %183 : vector<1x32xf32> to vector<8x32xf32>
    %185 = arith.addf %182, %184 : vector<8x32xf32>
    %c0_136 = arith.constant 0 : index
    %c0_137 = arith.constant 0 : index
    %c0_138 = arith.constant 0 : index
    %186 = vector.load %arg12[%c0_136, %c0_137, %c0_138] : memref<1x8x32xf32, #tpu.memory_space<vmem>>, vector<1x8x32xf32>
    %187 = vector.shape_cast %186 : vector<1x8x32xf32> to vector<8x32xf32>
    %188 = vector.shape_cast %185 : vector<8x32xf32> to vector<1x8x32xf32>
    tpu.vector_store %arg12[%c0_136, %c0_137, %c0_138], %188 {strides = array<i32>} : memref<1x8x32xf32, #tpu.memory_space<vmem>>, vector<1x8x32xf32>,
    return
  }
  func.func @transform_0(%arg0: i32) -> (i32, i32, i32) {
    %c0_i32 = arith.constant 0 : i32
    %c0_i32_0 = arith.constant 0 : i32
    %c0_i32_1 = arith.constant 0 : i32
    return %arg0, %c0_i32, %c0_i32_0 : i32, i32, i32
  }
  func.func @transform_1(%arg0: i32) -> (i32, i32, i32) {
    %c0_i32 = arith.constant 0 : i32
    %c0_i32_0 = arith.constant 0 : i32
    %c0_i32_1 = arith.constant 0 : i32
    return %arg0, %c0_i32, %c0_i32_0 : i32, i32, i32
  }
  func.func @transform_2(%arg0: i32) -> (i32, i32, i32) {
    %c0_i32 = arith.constant 0 : i32
    %c0_i32_0 = arith.constant 0 : i32
    %c0_i32_1 = arith.constant 0 : i32
    return %arg0, %c0_i32, %c0_i32_0 : i32, i32, i32
  }
  func.func @transform_3(%arg0: i32) -> (i32, i32, i32) {
    %c0_i32 = arith.constant 0 : i32
    %c0_i32_0 = arith.constant 0 : i32
    %c0_i32_1 = arith.constant 0 : i32
    %c0_i32_2 = arith.constant 0 : i32
    return %c0_i32, %c0_i32_0, %c0_i32_1 : i32, i32, i32
  }
  func.func @transform_4(%arg0: i32) -> (i32, i32, i32) {
    %c0_i32 = arith.constant 0 : i32
    %c0_i32_0 = arith.constant 0 : i32
    %c0_i32_1 = arith.constant 0 : i32
    %c0_i32_2 = arith.constant 0 : i32
    return %c0_i32, %c0_i32_0, %c0_i32_1 : i32, i32, i32
  }
  func.func @transform_5(%arg0: i32) -> (i32, i32, i32) {
    %c0_i32 = arith.constant 0 : i32
    %c0_i32_0 = arith.constant 0 : i32
    %c0_i32_1 = arith.constant 0 : i32
    %c0_i32_2 = arith.constant 0 : i32
    return %c0_i32, %c0_i32_0, %c0_i32_1 : i32, i32, i32
  }
  func.func @transform_6(%arg0: i32) -> (i32, i32, i32) {
    %c0_i32 = arith.constant 0 : i32
    %c0_i32_0 = arith.constant 0 : i32
    %c0_i32_1 = arith.constant 0 : i32
    %c0_i32_2 = arith.constant 0 : i32
    return %c0_i32, %c0_i32_0, %c0_i32_1 : i32, i32, i32
  }
  func.func @transform_7(%arg0: i32) -> (i32, i32, i32) {
    %c0_i32 = arith.constant 0 : i32
    %c0_i32_0 = arith.constant 0 : i32
    %c0_i32_1 = arith.constant 0 : i32
    %c0_i32_2 = arith.constant 0 : i32
    return %c0_i32, %c0_i32_0, %c0_i32_1 : i32, i32, i32
  }
  func.func @transform_8(%arg0: i32) -> (i32, i32, i32) {
    %c0_i32 = arith.constant 0 : i32
    %c0_i32_0 = arith.constant 0 : i32
    %c0_i32_1 = arith.constant 0 : i32
    %c0_i32_2 = arith.constant 0 : i32
    return %c0_i32, %c0_i32_0, %c0_i32_1 : i32, i32, i32
  }
  func.func @transform_9(%arg0: i32) -> (i32, i32, i32) {
    %c0_i32 = arith.constant 0 : i32
    %c0_i32_0 = arith.constant 0 : i32
    %c0_i32_1 = arith.constant 0 : i32
    %c0_i32_2 = arith.constant 0 : i32
    return %c0_i32, %c0_i32_0, %c0_i32_1 : i32, i32, i32
  }
  func.func @transform_10(%arg0: i32) -> (i32, i32) {
    %c0_i32 = arith.constant 0 : i32
    %c0_i32_0 = arith.constant 0 : i32
    %c0_i32_1 = arith.constant 0 : i32
    return %c0_i32, %c0_i32_0 : i32, i32
  }
  func.func @transform_11(%arg0: i32) -> (i32, i32, i32) {
    %c0_i32 = arith.constant 0 : i32
    %c0_i32_0 = arith.constant 0 : i32
    %c0_i32_1 = arith.constant 0 : i32
    return %arg0, %c0_i32, %c0_i32_0 : i32, i32, i32
  }
}

</mosaic_0001>

<llo_original>
// kernel: tpu_custom_call.1
$region0: #{tpu_custom_call.1}
  #allocation0 [shape = 'u32[]', space=smem, size = 0x4, offset = 0x4, fixed_abs, tag = 'smem constant byte address 0x4 - core index']
  #allocation1 [shape = 'u32[144,128]{1,0:T(1,128)}', space=vmem, size = 0x12000, scoped, tag = 'internal scratch']
  #allocation2 [shape = 'f32[32,8]{1,0:T(8,128)}', space=vmem, size = 0x4000, scoped, tag = 'scratch operand']
  %s0 = inlined_call_operand.vmem [shape: bf16[2,8,32], index: 0, kind: input, shape index: {}]
  %s1 = inlined_call_operand.vmem [shape: bf16[2,8,32], index: 1, kind: input, shape index: {}]
  %s2 = inlined_call_operand.vmem [shape: bf16[2,8,32], index: 2, kind: input, shape index: {}]
  %s3 = inlined_call_operand.vmem [shape: bf16[4,32,8], index: 3, kind: input, shape index: {}]
  %s4 = inlined_call_operand.vmem [shape: bf16[4,32,8], index: 4, kind: input, shape index: {}]
  %s5 = inlined_call_operand.vmem [shape: bf16[4,32,8], index: 5, kind: input, shape index: {}]
  %s6 = inlined_call_operand.vmem [shape: f32[4,1,8], index: 6, kind: input, shape index: {}]
  %s7 = inlined_call_operand.vmem [shape: f32[4,1,8], index: 7, kind: input, shape index: {}]
  %s8 = inlined_call_operand.vmem [shape: f32[4,1,8], index: 8, kind: input, shape index: {}]
  %s9 = inlined_call_operand.vmem [shape: bf16[4,8,32], index: 9, kind: input, shape index: {}]
  %s10 = inlined_call_operand.vmem [shape: f32[1,32], index: 10, kind: input, shape index: {}]
  %s11 = inlined_call_operand.hbm [shape: f32[2,8,32], index: 11, kind: output, shape index: {}]
  %s12 = sld [smem:[#allocation0]]
  $region77: #{tpu_custom_call.1} parent=0
    _
  %s14 = ssub.s32 1, %s12
  %s15 = scalar_select 0, %s14, %s12
  $region1: #{tpu_custom_call.1} parent=0
    #allocation3 [shape = 'u8[8192]{0}', space=vmem, size = 0x2000, scoped, tag = 'output window, operand 0']
    #allocation4 [shape = 's32[2]{0}', space=sflag, size = 0x8, scoped, tag = 'scoped memory for tpu_custom_call.1']
    %16 = vsyncpa [#allocation4], 0
    %s17 = scalar_lea.sflag [#allocation4], 1
    %18 = vsyncpa %s17, 0
    loop: start=0, step=1, limit=4
    $region2: #{tpu_custom_call.1} parent=1 // loop_pre_header
      _
    $region3: #{tpu_custom_call.1} parent=1 // loop_header
      %s20 = sphi 0, %s24
      %p21 = scmp.ge.s32.totalorder %s20, 4
      %s30 = sphi 0, %s32
      %s33 = sphi 0, %s30
      %s34 = sphi 0, %s33
      %s50 = sphi 0, %s34
      %s56 = sphi 0, %s58
      %s59 = sphi 0, %s56
      %s60 = sphi 0, %s59
      %s76 = sphi 0, %s60
      %s82 = sphi 0, %s84
      %s85 = sphi 0, %s82
      %s86 = sphi 0, %s85
      %s102 = sphi 0, %s86
      %s106 = sphi 0, %s106
      %s108 = sphi 0, %s106
      %s109 = sphi 0, %s108
      %s123 = sphi 0, %s109
      %s127 = sphi 0, %s127
      %s129 = sphi 0, %s127
      %s130 = sphi 0, %s129
      %s144 = sphi 0, %s130
      %s148 = sphi 0, %s148
      %s150 = sphi 0, %s148
      %s151 = sphi 0, %s150
      %s165 = sphi 0, %s151
      %s169 = sphi 0, %s169
      %s171 = sphi 0, %s169
      %s172 = sphi 0, %s171
      %s186 = sphi 0, %s172
      %s190 = sphi 0, %s190
      %s192 = sphi 0, %s190
      %s193 = sphi 0, %s192
      %s207 = sphi 0, %s193
      %s211 = sphi 0, %s211
      %s213 = sphi 0, %s211
      %s214 = sphi 0, %s213
      %s228 = sphi 0, %s214
      %s232 = sphi 0, %s232
      %s234 = sphi 0, %s232
      %s235 = sphi 0, %s234
      %s249 = sphi 0, %s235
      %s253 = sphi 0, %s253
      %s255 = sphi 0, %s253
      %s256 = sphi 0, %s255
      %s270 = sphi 0, %s256
      %s276 = sphi 0, %s278
      %s279 = sphi 0, %s276
      %s280 = sphi 0, %s279
      %s296 = sphi 0, %s280
    $region4: #{tpu_custom_call.1} parent=1 // loop_header_branch
      %23 = sbr.rel (%p21) target = $region8
    $region5: #{tpu_custom_call.1} parent=1 // loop_body
      %s25 = ssub.s32 %s20, 1
      %s26 = ssub.s32 %s20, 2
      %s27 = sadd.s32 %s20, 1
      %s28 = ssub.s32 %s20, %s27
      %p29 = scmp.eq.s32.totalorder %s28, 0
      %s31 = sadd.s32 %s30, 1
      %s32 = scalar_select %p29, %s30, %s31
      %p35 = pneg %p29
      %p36 = scmp.eq.s32.totalorder %s20, 1
      %p37 = por %p35, %p36
      %p38 = scmp.ne.s32.totalorder %s30, %s33
      %p39 = scmp.eq.s32.totalorder %s20, 0
      %p40 = por %p38, %p39
      %p41 = scmp.ne.s32.totalorder %s30, %s33
      %p42 = scmp.eq.s32.totalorder %s25, 1
      %p43 = por %p41, %p42
      %p44 = scmp.ne.s32.totalorder %s33, %s34
      %p45 = scmp.eq.s32.totalorder %s25, 0
      %p46 = por %p44, %p45
      %p47 = scmp.ne.s32.totalorder %s33, %s34
      %p48 = scmp.eq.s32.totalorder %s26, 1
      %p49 = por %p47, %p48
      %p51 = scmp.ne.s32.totalorder %s34, %s50
      %p52 = scmp.eq.s32.totalorder %s26, 0
      %p53 = por %p51, %p52
      %s54 = ssub.s32 %s20, %s27
      %p55 = scmp.eq.s32.totalorder %s54, 0
      %s57 = sadd.s32 %s56, 1
      %s58 = scalar_select %p55, %s56, %s57
      %p61 = pneg %p55
      %p62 = scmp.eq.s32.totalorder %s20, 1
      %p63 = por %p61, %p62
      %p64 = scmp.ne.s32.totalorder %s56, %s59
      %p65 = scmp.eq.s32.totalorder %s20, 0
      %p66 = por %p64, %p65
      %p67 = scmp.ne.s32.totalorder %s56, %s59
      %p68 = scmp.eq.s32.totalorder %s25, 1
      %p69 = por %p67, %p68
      %p70 = scmp.ne.s32.totalorder %s59, %s60
      %p71 = scmp.eq.s32.totalorder %s25, 0
      %p72 = por %p70, %p71
      %p73 = scmp.ne.s32.totalorder %s59, %s60
      %p74 = scmp.eq.s32.totalorder %s26, 1
      %p75 = por %p73, %p74
      %p77 = scmp.ne.s32.totalorder %s60, %s76
      %p78 = scmp.eq.s32.totalorder %s26, 0
      %p79 = por %p77, %p78
      %s80 = ssub.s32 %s20, %s27
      %p81 = scmp.eq.s32.totalorder %s80, 0
      %s83 = sadd.s32 %s82, 1
      %s84 = scalar_select %p81, %s82, %s83
      %p87 = pneg %p81
      %p88 = scmp.eq.s32.totalorder %s20, 1
      %p89 = por %p87, %p88
      %p90 = scmp.ne.s32.totalorder %s82, %s85
      %p91 = scmp.eq.s32.totalorder %s20, 0
      %p92 = por %p90, %p91
      %p93 = scmp.ne.s32.totalorder %s82, %s85
      %p94 = scmp.eq.s32.totalorder %s25, 1
      %p95 = por %p93, %p94
      %p96 = scmp.ne.s32.totalorder %s85, %s86
      %p97 = scmp.eq.s32.totalorder %s25, 0
      %p98 = por %p96, %p97
      %p99 = scmp.ne.s32.totalorder %s85, %s86
      %p100 = scmp.eq.s32.totalorder %s26, 1
      %p101 = por %p99, %p100
      %p103 = scmp.ne.s32.totalorder %s86, %s102
      %p104 = scmp.eq.s32.totalorder %s26, 0
      %p105 = por %p103, %p104
      %s107 = sadd.s32 %s106, 1
      %p110 = scmp.eq.s32.totalorder %s20, 1
      %p111 = scmp.ne.s32.totalorder %s106, %s108
      %p112 = scmp.eq.s32.totalorder %s20, 0
      %p113 = por %p111, %p112
      %p114 = scmp.ne.s32.totalorder %s106, %s108
      %p115 = scmp.eq.s32.totalorder %s25, 1
      %p116 = por %p114, %p115
      %p117 = scmp.ne.s32.totalorder %s108, %s109
      %p118 = scmp.eq.s32.totalorder %s25, 0
      %p119 = por %p117, %p118
      %p120 = scmp.ne.s32.totalorder %s108, %s109
      %p121 = scmp.eq.s32.totalorder %s26, 1
      %p122 = por %p120, %p121
      %p124 = scmp.ne.s32.totalorder %s109, %s123
      %p125 = scmp.eq.s32.totalorder %s26, 0
      %p126 = por %p124, %p125
      %s128 = sadd.s32 %s127, 1
      %p131 = scmp.eq.s32.totalorder %s20, 1
      %p132 = scmp.ne.s32.totalorder %s127, %s129
      %p133 = scmp.eq.s32.totalorder %s20, 0
      %p134 = por %p132, %p133
      %p135 = scmp.ne.s32.totalorder %s127, %s129
      %p136 = scmp.eq.s32.totalorder %s25, 1
      %p137 = por %p135, %p136
      %p138 = scmp.ne.s32.totalorder %s129, %s130
      %p139 = scmp.eq.s32.totalorder %s25, 0
      %p140 = por %p138, %p139
      %p141 = scmp.ne.s32.totalorder %s129, %s130
      %p142 = scmp.eq.s32.totalorder %s26, 1
      %p143 = por %p141, %p142
      %p145 = scmp.ne.s32.totalorder %s130, %s144
      %p146 = scmp.eq.s32.totalorder %s26, 0
      %p147 = por %p145, %p146
      %s149 = sadd.s32 %s148, 1
      %p152 = scmp.eq.s32.totalorder %s20, 1
      %p153 = scmp.ne.s32.totalorder %s148, %s150
      %p154 = scmp.eq.s32.totalorder %s20, 0
      %p155 = por %p153, %p154
      %p156 = scmp.ne.s32.totalorder %s148, %s150
      %p157 = scmp.eq.s32.totalorder %s25, 1
      %p158 = por %p156, %p157
      %p159 = scmp.ne.s32.totalorder %s150, %s151
      %p160 = scmp.eq.s32.totalorder %s25, 0
      %p161 = por %p159, %p160
      %p162 = scmp.ne.s32.totalorder %s150, %s151
      %p163 = scmp.eq.s32.totalorder %s26, 1
      %p164 = por %p162, %p163
      %p166 = scmp.ne.s32.totalorder %s151, %s165
      %p167 = scmp.eq.s32.totalorder %s26, 0
      %p168 = por %p166, %p167
      %s170 = sadd.s32 %s169, 1
      %p173 = scmp.eq.s32.totalorder %s20, 1
      %p174 = scmp.ne.s32.totalorder %s169, %s171
      %p175 = scmp.eq.s32.totalorder %s20, 0
      %p176 = por %p174, %p175
      %p177 = scmp.ne.s32.totalorder %s169, %s171
      %p178 = scmp.eq.s32.totalorder %s25, 1
      %p179 = por %p177, %p178
      %p180 = scmp.ne.s32.totalorder %s171, %s172
      %p181 = scmp.eq.s32.totalorder %s25, 0
      %p182 = por %p180, %p181
      %p183 = scmp.ne.s32.totalorder %s171, %s172
      %p184 = scmp.eq.s32.totalorder %s26, 1
      %p185 = por %p183, %p184
      %p187 = scmp.ne.s32.totalorder %s172, %s186
      %p188 = scmp.eq.s32.totalorder %s26, 0
      %p189 = por %p187, %p188
      %s191 = sadd.s32 %s190, 1
      %p194 = scmp.eq.s32.totalorder %s20, 1
      %p195 = scmp.ne.s32.totalorder %s190, %s192
      %p196 = scmp.eq.s32.totalorder %s20, 0
      %p197 = por %p195, %p196
      %p198 = scmp.ne.s32.totalorder %s190, %s192
      %p199 = scmp.eq.s32.totalorder %s25, 1
      %p200 = por %p198, %p199
      %p201 = scmp.ne.s32.totalorder %s192, %s193
      %p202 = scmp.eq.s32.totalorder %s25, 0
      %p203 = por %p201, %p202
      %p204 = scmp.ne.s32.totalorder %s192, %s193
      %p205 = scmp.eq.s32.totalorder %s26, 1
      %p206 = por %p204, %p205
      %p208 = scmp.ne.s32.totalorder %s193, %s207
      %p209 = scmp.eq.s32.totalorder %s26, 0
      %p210 = por %p208, %p209
      %s212 = sadd.s32 %s211, 1
      %p215 = scmp.eq.s32.totalorder %s20, 1
      %p216 = scmp.ne.s32.totalorder %s211, %s213
      %p217 = scmp.eq.s32.totalorder %s20, 0
      %p218 = por %p216, %p217
      %p219 = scmp.ne.s32.totalorder %s211, %s213
      %p220 = scmp.eq.s32.totalorder %s25, 1
      %p221 = por %p219, %p220
      %p222 = scmp.ne.s32.totalorder %s213, %s214
      %p223 = scmp.eq.s32.totalorder %s25, 0
      %p224 = por %p222, %p223
      %p225 = scmp.ne.s32.totalorder %s213, %s214
      %p226 = scmp.eq.s32.totalorder %s26, 1
      %p227 = por %p225, %p226
      %p229 = scmp.ne.s32.totalorder %s214, %s228
      %p230 = scmp.eq.s32.totalorder %s26, 0
      %p231 = por %p229, %p230
      %s233 = sadd.s32 %s232, 1
      %p236 = scmp.eq.s32.totalorder %s20, 1
      %p237 = scmp.ne.s32.totalorder %s232, %s234
      %p238 = scmp.eq.s32.totalorder %s20, 0
      %p239 = por %p237, %p238
      %p240 = scmp.ne.s32.totalorder %s232, %s234
      %p241 = scmp.eq.s32.totalorder %s25, 1
      %p242 = por %p240, %p241
      %p243 = scmp.ne.s32.totalorder %s234, %s235
      %p244 = scmp.eq.s32.totalorder %s25, 0
      %p245 = por %p243, %p244
      %p246 = scmp.ne.s32.totalorder %s234, %s235
      %p247 = scmp.eq.s32.totalorder %s26, 1
      %p248 = por %p246, %p247
      %p250 = scmp.ne.s32.totalorder %s235, %s249
      %p251 = scmp.eq.s32.totalorder %s26, 0
      %p252 = por %p250, %p251
      %s254 = sadd.s32 %s253, 1
      %p257 = scmp.eq.s32.totalorder %s20, 1
      %p258 = scmp.ne.s32.totalorder %s253, %s255
      %p259 = scmp.eq.s32.totalorder %s20, 0
      %p260 = por %p258, %p259
      %p261 = scmp.ne.s32.totalorder %s253, %s255
      %p262 = scmp.eq.s32.totalorder %s25, 1
      %p263 = por %p261, %p262
      %p264 = scmp.ne.s32.totalorder %s255, %s256
      %p265 = scmp.eq.s32.totalorder %s25, 0
      %p266 = por %p264, %p265
      %p267 = scmp.ne.s32.totalorder %s255, %s256
      %p268 = scmp.eq.s32.totalorder %s26, 1
      %p269 = por %p267, %p268
      %p271 = scmp.ne.s32.totalorder %s256, %s270
      %p272 = scmp.eq.s32.totalorder %s26, 0
      %p273 = por %p271, %p272
      %s274 = ssub.s32 %s20, %s27
      %p275 = scmp.eq.s32.totalorder %s274, 0
      %s277 = sadd.s32 %s276, 1
      %s278 = scalar_select %p275, %s276, %s277
      %p281 = pneg %p275
      %p282 = scmp.eq.s32.totalorder %s20, 1
      %p283 = por %p281, %p282
      %p284 = scmp.ne.s32.totalorder %s276, %s279
      %p285 = scmp.eq.s32.totalorder %s20, 0
      %p286 = por %p284, %p285
      %p287 = scmp.ne.s32.totalorder %s276, %s279
      %p288 = scmp.eq.s32.totalorder %s25, 1
      %p289 = por %p287, %p288
      %p290 = scmp.ne.s32.totalorder %s279, %s280
      %p291 = scmp.eq.s32.totalorder %s25, 0
      %p292 = por %p290, %p291
      %p293 = scmp.ne.s32.totalorder %s279, %s280
      %p294 = scmp.eq.s32.totalorder %s26, 1
      %p295 = por %p293, %p294
      %p297 = scmp.ne.s32.totalorder %s280, %s296
      %p298 = scmp.eq.s32.totalorder %s26, 0
      %p299 = por %p297, %p298
      %p300 = scmp.le.s32.totalorder 1, %s20
      %p301 = scmp.lt.s32.totalorder %s20, 3
      %p302 = pnand %p300, %p301
      %p303 = pneg %p302
      // Predicated region
      $region9: #{tpu_custom_call.1} parent=5 // pred_check
        _
      $region10: #{tpu_custom_call.1} parent=5 // pred_check_branch
        %305 = sbr.rel (%p302) target = $region12
      $region11: #{tpu_custom_call.1} parent=5 // pred_region
        %s306 = ssub.s32 %s20, 1
        // Predicated region
        $region13: #{tpu_custom_call.1} parent=11 // pred_check
          %p307 = pneg %p119
        $region14: #{tpu_custom_call.1} parent=11 // pred_check_branch
          %309 = sbr.rel (%p307) target = $region16
        $region15: #{tpu_custom_call.1} parent=11 // pred_region
          _
        $region16: #{tpu_custom_call.1} parent=11 // pred_fallthru
          _
        // Predicated region
        $region17: #{tpu_custom_call.1} parent=11 // pred_check
          %p310 = pneg %p140
        $region18: #{tpu_custom_call.1} parent=11 // pred_check_branch
          %312 = sbr.rel (%p310) target = $region20
        $region19: #{tpu_custom_call.1} parent=11 // pred_region
          _
        $region20: #{tpu_custom_call.1} parent=11 // pred_fallthru
          _
        // Predicated region
        $region21: #{tpu_custom_call.1} parent=11 // pred_check
          %p313 = pneg %p161
        $region22: #{tpu_custom_call.1} parent=11 // pred_check_branch
          %315 = sbr.rel (%p313) target = $region24
        $region23: #{tpu_custom_call.1} parent=11 // pred_region
          _
        $region24: #{tpu_custom_call.1} parent=11 // pred_fallthru
          _
        // Predicated region
        $region25: #{tpu_custom_call.1} parent=11 // pred_check
          %p316 = pneg %p182
        $region26: #{tpu_custom_call.1} parent=11 // pred_check_branch
          %318 = sbr.rel (%p316) target = $region28
        $region27: #{tpu_custom_call.1} parent=11 // pred_region
          _
        $region28: #{tpu_custom_call.1} parent=11 // pred_fallthru
          _
        // Predicated region
        $region29: #{tpu_custom_call.1} parent=11 // pred_check
          %p319 = pneg %p203
        $region30: #{tpu_custom_call.1} parent=11 // pred_check_branch
          %321 = sbr.rel (%p319) target = $region32
        $region31: #{tpu_custom_call.1} parent=11 // pred_region
          _
        $region32: #{tpu_custom_call.1} parent=11 // pred_fallthru
          _
        // Predicated region
        $region33: #{tpu_custom_call.1} parent=11 // pred_check
          %p322 = pneg %p224
        $region34: #{tpu_custom_call.1} parent=11 // pred_check_branch
          %324 = sbr.rel (%p322) target = $region36
        $region35: #{tpu_custom_call.1} parent=11 // pred_region
          _
        $region36: #{tpu_custom_call.1} parent=11 // pred_fallthru
          _
        // Predicated region
        $region37: #{tpu_custom_call.1} parent=11 // pred_check
          %p325 = pneg %p245
        $region38: #{tpu_custom_call.1} parent=11 // pred_check_branch
          %327 = sbr.rel (%p325) target = $region40
        $region39: #{tpu_custom_call.1} parent=11 // pred_region
          _
        $region40: #{tpu_custom_call.1} parent=11 // pred_fallthru
          _
        // Predicated region
        $region41: #{tpu_custom_call.1} parent=11 // pred_check
          %p328 = pneg %p266
        $region42: #{tpu_custom_call.1} parent=11 // pred_check_branch
          %330 = sbr.rel (%p328) target = $region44
        $region43: #{tpu_custom_call.1} parent=11 // pred_region
          _
        $region44: #{tpu_custom_call.1} parent=11 // pred_fallthru
          _
      $region12: #{tpu_custom_call.1} parent=5 // pred_fallthru
        _
      %p331 = scmp.lt.s32.totalorder %s20, 2
      // Predicated region
      $region45: #{tpu_custom_call.1} parent=5 // pred_check
        %p332 = pneg %p331
      $region46: #{tpu_custom_call.1} parent=5 // pred_check_branch
        %334 = sbr.rel (%p332) target = $region48
      $region47: #{tpu_custom_call.1} parent=5 // pred_region
        // Predicated region
        $region49: #{tpu_custom_call.1} parent=47 // pred_check
          %p335 = pneg %p40
        $region50: #{tpu_custom_call.1} parent=47 // pred_check_branch
          %337 = sbr.rel (%p335) target = $region52
        $region51: #{tpu_custom_call.1} parent=47 // pred_region
          %p338 = scmp.lt.s32.totalorder %s20, 1
          %s339 = scalar_select %p338, %s20, 1
          %s340 = smul.addr %s339, 4
          %s341 = scalar_lea.vmem %s0, %s340
        $region52: #{tpu_custom_call.1} parent=47 // pred_fallthru
          _
        // Predicated region
        $region53: #{tpu_custom_call.1} parent=47 // pred_check
          %p342 = pneg %p66
        $region54: #{tpu_custom_call.1} parent=47 // pred_check_branch
          %344 = sbr.rel (%p342) target = $region56
        $region55: #{tpu_custom_call.1} parent=47 // pred_region
          %p345 = scmp.lt.s32.totalorder %s20, 1
          %s346 = scalar_select %p345, %s20, 1
          %s347 = smul.addr %s346, 4
          %s348 = scalar_lea.vmem %s1, %s347
        $region56: #{tpu_custom_call.1} parent=47 // pred_fallthru
          _
        // Predicated region
        $region57: #{tpu_custom_call.1} parent=47 // pred_check
          %p349 = pneg %p92
        $region58: #{tpu_custom_call.1} parent=47 // pred_check_branch
          %351 = sbr.rel (%p349) target = $region60
        $region59: #{tpu_custom_call.1} parent=47 // pred_region
          %p352 = scmp.lt.s32.totalorder %s20, 1
          %s353 = scalar_select %p352, %s20, 1
          %s354 = smul.addr %s353, 4
          %s355 = scalar_lea.vmem %s2, %s354
        $region60: #{tpu_custom_call.1} parent=47 // pred_fallthru
          _
      $region48: #{tpu_custom_call.1} parent=5 // pred_fallthru
        _
      %p356 = scmp.le.s32.totalorder 1, %s20
      %p357 = scmp.lt.s32.totalorder %s20, 3
      %p358 = pnand %p356, %p357
      %p359 = pneg %p358
      // Predicated region
      $region61: #{tpu_custom_call.1} parent=5 // pred_check
        _
      $region62: #{tpu_custom_call.1} parent=5 // pred_check_branch
        %361 = sbr.rel (%p358) target = $region64
      $region63: #{tpu_custom_call.1} parent=5 // pred_region
        %s362 = ssub.s32 %s20, 1
        %p363 = scmp.lt.s32.totalorder %s25, 1
        %s364 = scalar_select %p363, %s25, 1
        %s365 = smul.addr %s364, 4
        %s366 = scalar_lea.vmem %s0, %s365
        %p367 = pneg %p46
        %p368 = pneg %p43
        %p369 = scmp.lt.s32.totalorder %s25, 1
        %s370 = scalar_select %p369, %s25, 1
        %s371 = smul.addr %s370, 4
        %s372 = scalar_lea.vmem %s1, %s371
        %p373 = pneg %p72
        %p374 = pneg %p69
        %p375 = scmp.lt.s32.totalorder %s25, 1
        %s376 = scalar_select %p375, %s25, 1
        %s377 = smul.addr %s376, 4
        %s378 = scalar_lea.vmem %s2, %s377
        %p379 = pneg %p98
        %p380 = pneg %p95
        %p381 = pneg %p119
        %p382 = pneg %p116
        %p383 = pneg %p140
        %p384 = pneg %p137
        %p385 = pneg %p161
        %p386 = pneg %p158
        %p387 = pneg %p182
        %p388 = pneg %p179
        %p389 = pneg %p203
        %p390 = pneg %p200
        %p391 = pneg %p224
        %p392 = pneg %p221
        %p393 = pneg %p245
        %p394 = pneg %p242
        %p395 = pneg %p266
        %p396 = pneg %p263
        %p397 = pneg %p292
        %p398 = pneg %p289
        %s399 = sand.u32 %s279, 1
        %s400 = scalar_lea.sflag [#allocation4], %s399
        %s401 = sand.u32 %s279, 1
        %s402 = smul.addr %s401, 8
        %s403 = scalar_lea.vmem [#allocation3], %s402
        %p404 = scmp.lt.s32.totalorder %s25, 1
        %s405 = scalar_select %p404, %s25, 1
        %s406 = smul.addr %s405, 4
        %s407 = scalar_lea.vmem %s0, %s406
        %p408 = scmp.lt.s32.totalorder %s25, 1
        %s409 = scalar_select %p408, %s25, 1
        %s410 = smul.addr %s409, 4
        %s411 = scalar_lea.vmem %s1, %s410
        %p412 = scmp.lt.s32.totalorder %s25, 1
        %s413 = scalar_select %p412, %s25, 1
        %s414 = smul.addr %s413, 4
        %s415 = scalar_lea.vmem %s2, %s414
        %v417 = vld [vmem:[%s407] sm:$0xf]
        %v418 = vld [vmem:[%s411] sm:$0xf]
        %v419 = vld [vmem:[%s415] sm:$0xf]
        %v420 = vld [vmem:[%s3] sm:$0xf]
        %v421 = vld [vmem:[%s3 + $0x4] sm:$0xf]
        %v422 = vld [vmem:[%s3 + $0x8] sm:$0xf]
        %v423 = vld [vmem:[%s3 + $0xc] sm:$0xf]
        %v424 = vld [vmem:[%s6] sm:$0x1]
        %v426 = vlaneseq
        %v427 = vshrl.u32 %v426, 7
        %v428 = vsub.s32 0, %v427
        %v429 = vrot.slane %v424, %v428
        %v435 = vunpack.c.l.b16 %v420
        %v436 = vunpack.c.l.b16 %v421
        %v437 = vunpack.c.l.b16 %v422
        %v438 = vunpack.c.l.b16 %v423
        %v439 = vpack.c.b16 %v436, %v435
        %v440 = vpack.c.b16 %v438, %v437
        %vm443 = vcmask 261120
        %v445 = vsel %vm443, %v417, 0
        %447 = vmatprep.subr.bf16.mxu0 0
        %448 = vmatpush1.bf16.msra.mxu0 0
        %449 = vmatprep.subr.bf16.mxu0 0
        %450 = vmatpush1.bf16.msra.mxu0 0
        %451 = vmatprep.subr.bf16.mxu0 0
        %452 = vmatpush1.bf16.msra.mxu0 0
        %453 = vmatprep.subr.bf16.mxu0 0
        %454 = vmatpush1.bf16.msra.mxu0 0
        %455 = vmatprep.subr.bf16.mxu0 0
        %456 = vmatpush1.bf16.msra.mxu0 0
        %457 = vmatprep.subr.bf16.mxu0 0
        %458 = vmatpush1.bf16.msra.mxu0 0
        %459 = vmatprep.subr.bf16.mxu0 0
        %460 = vmatpush1.bf16.msra.mxu0 %v440
        %461 = vmatprep.subr.bf16.mxu0 0
        %462 = vmatpush1.bf16.msra.mxu0 %v439
        %463 = vmatprep.subr.bf16.mxu0 0
        %464 = vmatpush2.bf16.msra.mxu0 0
        %465 = vmatprep.subr.bf16.mxu0 0
        %466 = vmatpush2.bf16.msra.mxu0 0
        %467 = vmatprep.subr.bf16.mxu0 0
        %468 = vmatpush2.bf16.msra.mxu0 0
        %469 = vmatprep.subr.bf16.mxu0 0
        %470 = vmatpush2.bf16.msra.mxu0 0
        %471 = vmatprep.subr.bf16.mxu0 0
        %472 = vmatpush2.bf16.msra.mxu0 0
        %473 = vmatprep.subr.bf16.mxu0 0
        %474 = vmatpush2.bf16.msra.mxu0 0
        %475 = vmatprep.subr.bf16.mxu0 0
        %476 = vmatpush2.bf16.msra.mxu0 0
        %477 = vmatprep.subr.bf16.mxu0 0
        %478 = vmatpush2.bf16.msra.mxu0 0
        %479 = vmatprep.mubr.bf16.mxu0 0
        %480 = vmatmul.mubr.bf16.gmra.mxu0 %v445
        %v481 = vpop.f32.mrf.mxu0
        %v482 = vadd.f32 %v429, %v481
        %v483 = vpop.f32.mrf.mxu0
        %v484 = vpop.f32.mrf.mxu0
        %v485 = vpop.f32.mrf.mxu0
        %486 = vdwg.mxu0
        %v487 = vld [vmem:[%s4] sm:$0xf]
        %v488 = vld [vmem:[%s4 + $0x4] sm:$0xf]
        %v489 = vld [vmem:[%s4 + $0x8] sm:$0xf]
        %v490 = vld [vmem:[%s4 + $0xc] sm:$0xf]
        %v491 = vld [vmem:[%s7] sm:$0x1]
        %v493 = vlaneseq
        %v494 = vshrl.u32 %v493, 7
        %v495 = vsub.s32 0, %v494
        %v496 = vrot.slane %v491, %v495
        %v502 = vunpack.c.l.b16 %v487
        %v503 = vunpack.c.l.b16 %v488
        %v504 = vunpack.c.l.b16 %v489
        %v505 = vunpack.c.l.b16 %v490
        %v506 = vpack.c.b16 %v503, %v502
        %v507 = vpack.c.b16 %v505, %v504
        %v511 = vsel %vm443, %v418, 0
        %513 = vmatprep.subr.bf16.mxu0 0
        %514 = vmatpush1.bf16.msra.mxu0 0
        %515 = vmatprep.subr.bf16.mxu0 0
        %516 = vmatpush1.bf16.msra.mxu0 0
        %517 = vmatprep.subr.bf16.mxu0 0
        %518 = vmatpush1.bf16.msra.mxu0 0
        %519 = vmatprep.subr.bf16.mxu0 0
        %520 = vmatpush1.bf16.msra.mxu0 0
        %521 = vmatprep.subr.bf16.mxu0 0
        %522 = vmatpush1.bf16.msra.mxu0 0
        %523 = vmatprep.subr.bf16.mxu0 0
        %524 = vmatpush1.bf16.msra.mxu0 0
        %525 = vmatprep.subr.bf16.mxu0 0
        %526 = vmatpush1.bf16.msra.mxu0 %v507
        %527 = vmatprep.subr.bf16.mxu0 0
        %528 = vmatpush1.bf16.msra.mxu0 %v506
        %529 = vmatprep.subr.bf16.mxu0 0
        %530 = vmatpush2.bf16.msra.mxu0 0
        %531 = vmatprep.subr.bf16.mxu0 0
        %532 = vmatpush2.bf16.msra.mxu0 0
        %533 = vmatprep.subr.bf16.mxu0 0
        %534 = vmatpush2.bf16.msra.mxu0 0
        %535 = vmatprep.subr.bf16.mxu0 0
        %536 = vmatpush2.bf16.msra.mxu0 0
        %537 = vmatprep.subr.bf16.mxu0 0
        %538 = vmatpush2.bf16.msra.mxu0 0
        %539 = vmatprep.subr.bf16.mxu0 0
        %540 = vmatpush2.bf16.msra.mxu0 0
        %541 = vmatprep.subr.bf16.mxu0 0
        %542 = vmatpush2.bf16.msra.mxu0 0
        %543 = vmatprep.subr.bf16.mxu0 0
        %544 = vmatpush2.bf16.msra.mxu0 0
        %545 = vmatprep.mubr.bf16.mxu0 0
        %546 = vmatmul.mubr.bf16.gmra.mxu0 %v511
        %v547 = vpop.f32.mrf.mxu0
        %v548 = vadd.f32 %v496, %v547
        %v549 = vpop.f32.mrf.mxu0
        %v550 = vpop.f32.mrf.mxu0
        %v551 = vpop.f32.mrf.mxu0
        %552 = vdwg.mxu0
        %v553 = vld [vmem:[%s5] sm:$0xf]
        %v554 = vld [vmem:[%s5 + $0x4] sm:$0xf]
        %v555 = vld [vmem:[%s5 + $0x8] sm:$0xf]
        %v556 = vld [vmem:[%s5 + $0xc] sm:$0xf]
        %v557 = vld [vmem:[%s8] sm:$0x1]
        %v559 = vlaneseq
        %v560 = vshrl.u32 %v559, 7
        %v561 = vsub.s32 0, %v560
        %v562 = vrot.slane %v557, %v561
        %v568 = vunpack.c.l.b16 %v553
        %v569 = vunpack.c.l.b16 %v554
        %v570 = vunpack.c.l.b16 %v555
        %v571 = vunpack.c.l.b16 %v556
        %v572 = vpack.c.b16 %v569, %v568
        %v573 = vpack.c.b16 %v571, %v570
        %v577 = vsel %vm443, %v419, 0
        %579 = vmatprep.subr.bf16.mxu0 0
        %580 = vmatpush1.bf16.msra.mxu0 0
        %581 = vmatprep.subr.bf16.mxu0 0
        %582 = vmatpush1.bf16.msra.mxu0 0
        %583 = vmatprep.subr.bf16.mxu0 0
        %584 = vmatpush1.bf16.msra.mxu0 0
        %585 = vmatprep.subr.bf16.mxu0 0
        %586 = vmatpush1.bf16.msra.mxu0 0
        %587 = vmatprep.subr.bf16.mxu0 0
        %588 = vmatpush1.bf16.msra.mxu0 0
        %589 = vmatprep.subr.bf16.mxu0 0
        %590 = vmatpush1.bf16.msra.mxu0 0
        %591 = vmatprep.subr.bf16.mxu0 0
        %592 = vmatpush1.bf16.msra.mxu0 %v573
        %593 = vmatprep.subr.bf16.mxu0 0
        %594 = vmatpush1.bf16.msra.mxu0 %v572
        %595 = vmatprep.subr.bf16.mxu0 0
        %596 = vmatpush2.bf16.msra.mxu0 0
        %597 = vmatprep.subr.bf16.mxu0 0
        %598 = vmatpush2.bf16.msra.mxu0 0
        %599 = vmatprep.subr.bf16.mxu0 0
        %600 = vmatpush2.bf16.msra.mxu0 0
        %601 = vmatprep.subr.bf16.mxu0 0
        %602 = vmatpush2.bf16.msra.mxu0 0
        %603 = vmatprep.subr.bf16.mxu0 0
        %604 = vmatpush2.bf16.msra.mxu0 0
        %605 = vmatprep.subr.bf16.mxu0 0
        %606 = vmatpush2.bf16.msra.mxu0 0
        %607 = vmatprep.subr.bf16.mxu0 0
        %608 = vmatpush2.bf16.msra.mxu0 0
        %609 = vmatprep.subr.bf16.mxu0 0
        %610 = vmatpush2.bf16.msra.mxu0 0
        %611 = vmatprep.mubr.bf16.mxu0 0
        %612 = vmatmul.mubr.bf16.gmra.mxu0 %v577
        %v613 = vpop.f32.mrf.mxu0
        %v614 = vadd.f32 %v562, %v613
        %v615 = vpop.f32.mrf.mxu0
        %v616 = vpop.f32.mrf.mxu0
        %v617 = vpop.f32.mrf.mxu0
        %618 = vdwg.mxu0
        %v619 = vpack.c.bf16 %v482, %v482
        %v620 = vpack.c.bf16 %v548, %v548
        %vm621 = vcmask 64512
        %v623 = vsel %vm621, %v619, 0
        %v626 = vsel %vm621, %v620, 0
        %628 = vmatprep.subr.bf16.mxu0 0
        %629 = vmatpush1.bf16.xpose.msra.mxu0 0
        %630 = vmatprep.subr.bf16.mxu0 0
        %631 = vmatpush1.bf16.xpose.msra.mxu0 0
        %632 = vmatprep.subr.bf16.mxu0 0
        %633 = vmatpush1.bf16.xpose.msra.mxu0 0
        %634 = vmatprep.subr.bf16.mxu0 0
        %635 = vmatpush1.bf16.xpose.msra.mxu0 0
        %636 = vmatprep.subr.bf16.mxu0 0
        %637 = vmatpush1.bf16.xpose.msra.mxu0 0
        %638 = vmatprep.subr.bf16.mxu0 0
        %639 = vmatpush1.bf16.xpose.msra.mxu0 0
        %640 = vmatprep.subr.bf16.mxu0 0
        %641 = vmatpush1.bf16.xpose.msra.mxu0 0
        %642 = vmatprep.subr.bf16.mxu0 0
        %643 = vmatpush1.bf16.xpose.msra.mxu0 %v626
        %644 = vmatprep.subr.bf16.mxu0 0
        %645 = vmatpush2.bf16.xpose.msra.mxu0 0
        %646 = vmatprep.subr.bf16.mxu0 0
        %647 = vmatpush2.bf16.xpose.msra.mxu0 0
        %648 = vmatprep.subr.bf16.mxu0 0
        %649 = vmatpush2.bf16.xpose.msra.mxu0 0
        %650 = vmatprep.subr.bf16.mxu0 0
        %651 = vmatpush2.bf16.xpose.msra.mxu0 0
        %652 = vmatprep.subr.bf16.mxu0 0
        %653 = vmatpush2.bf16.xpose.msra.mxu0 0
        %654 = vmatprep.subr.bf16.mxu0 0
        %655 = vmatpush2.bf16.xpose.msra.mxu0 0
        %656 = vmatprep.subr.bf16.mxu0 0
        %657 = vmatpush2.bf16.xpose.msra.mxu0 0
        %658 = vmatprep.subr.bf16.mxu0 0
        %659 = vmatpush2.bf16.xpose.msra.mxu0 0
        %660 = vmatprep.mubr.bf16.mxu0 0
        %661 = vmatmul.mubr.bf16.gmra.mxu0 %v623
        %v662 = vpop.f32.mrf.mxu0
        %v663 = vadd.f32 0.0, %v662
        %v664 = vpop.f32.mrf.mxu0
        %v665 = vpop.f32.mrf.mxu0
        %v666 = vpop.f32.mrf.mxu0
        %667 = vdwg.mxu0
        %v668 = vsel %vm621, %v663, -inf
        %669 = vmax.xlane.f32.xlu0 %v668
        %v670 = vpop.xlane.xlu0 %669
        %v671 = vsub.f32 %v663, %v670
        %v672 = vmul.f32 %v671, 1.442695
        %v673 = vpow.pop %v672
        %v674 = vsel %vm621, %v673, 0.0
        %675 = vadd.xlane.f32.xlu0 %v674
        %v676 = vpop.xlane.xlu0 %675
        %v677 = vrcp.pop %v676
        %v678 = vmul.f32 %v673, %v677
        %v679 = vpack.c.bf16 %v678, %v678
        %v680 = vpack.c.bf16 %v614, %v614
        %v682 = vsel %vm621, %v679, 0
        %vm684 = vcmask 1043456
        %v686 = vsel %vm684, %v680, 0
        %688 = vmatprep.subr.bf16.mxu0 0
        %689 = vmatpush1.bf16.msra.mxu0 0
        %690 = vmatprep.subr.bf16.mxu0 0
        %691 = vmatpush1.bf16.msra.mxu0 0
        %692 = vmatprep.subr.bf16.mxu0 0
        %693 = vmatpush1.bf16.msra.mxu0 0
        %694 = vmatprep.subr.bf16.mxu0 0
        %695 = vmatpush1.bf16.msra.mxu0 0
        %696 = vmatprep.subr.bf16.mxu0 0
        %697 = vmatpush1.bf16.msra.mxu0 0
        %698 = vmatprep.subr.bf16.mxu0 0
        %699 = vmatpush1.bf16.msra.mxu0 0
        %700 = vmatprep.subr.bf16.mxu0 0
        %701 = vmatpush1.bf16.msra.mxu0 0
        %702 = vmatprep.subr.bf16.mxu0 0
        %703 = vmatpush1.bf16.msra.mxu0 %v686
        %704 = vmatprep.subr.bf16.mxu0 0
        %705 = vmatpush2.bf16.msra.mxu0 0
        %706 = vmatprep.subr.bf16.mxu0 0
        %707 = vmatpush2.bf16.msra.mxu0 0
        %708 = vmatprep.subr.bf16.mxu0 0
        %709 = vmatpush2.bf16.msra.mxu0 0
        %710 = vmatprep.subr.bf16.mxu0 0
        %711 = vmatpush2.bf16.msra.mxu0 0
        %712 = vmatprep.subr.bf16.mxu0 0
        %713 = vmatpush2.bf16.msra.mxu0 0
        %714 = vmatprep.subr.bf16.mxu0 0
        %715 = vmatpush2.bf16.msra.mxu0 0
        %716 = vmatprep.subr.bf16.mxu0 0
        %717 = vmatpush2.bf16.msra.mxu0 0
        %718 = vmatprep.subr.bf16.mxu0 0
        %719 = vmatpush2.bf16.msra.mxu0 0
        %720 = vmatprep.mubr.bf16.mxu0 0
        %721 = vmatmul.mubr.bf16.gmra.mxu0 %v682
        %v722 = vpop.f32.mrf.mxu0
        %v723 = vadd.f32 0.0, %v722
        %v724 = vpop.f32.mrf.mxu0
        %v725 = vpop.f32.mrf.mxu0
        %v726 = vpop.f32.mrf.mxu0
        %727 = vdwg.mxu0
        %728 = vst.msk [vmem:[#allocation2] sm:$0xff] %vm621, %v723
        %s729 = scalar_lea.vmem %s3, 16
        %v730 = vld [vmem:[%s729] sm:$0xf]
        %v731 = vld [vmem:[%s729 + $0x4] sm:$0xf]
        %v732 = vld [vmem:[%s729 + $0x8] sm:$0xf]
        %v733 = vld [vmem:[%s729 + $0xc] sm:$0xf]
        %s734 = scalar_lea.vmem %s6, 1
        %v735 = vld [vmem:[%s734] sm:$0x1]
        %v737 = vlaneseq
        %v738 = vshrl.u32 %v737, 7
        %v739 = vsub.s32 0, %v738
        %v740 = vrot.slane %v735, %v739
        %v746 = vunpack.c.l.b16 %v730
        %v747 = vunpack.c.l.b16 %v731
        %v748 = vunpack.c.l.b16 %v732
        %v749 = vunpack.c.l.b16 %v733
        %v750 = vpack.c.b16 %v747, %v746
        %v751 = vpack.c.b16 %v749, %v748
        %754 = vmatprep.subr.bf16.mxu0 0
        %755 = vmatpush1.bf16.msra.mxu0 0
        %756 = vmatprep.subr.bf16.mxu0 0
        %757 = vmatpush1.bf16.msra.mxu0 0
        %758 = vmatprep.subr.bf16.mxu0 0
        %759 = vmatpush1.bf16.msra.mxu0 0
        %760 = vmatprep.subr.bf16.mxu0 0
        %761 = vmatpush1.bf16.msra.mxu0 0
        %762 = vmatprep.subr.bf16.mxu0 0
        %763 = vmatpush1.bf16.msra.mxu0 0
        %764 = vmatprep.subr.bf16.mxu0 0
        %765 = vmatpush1.bf16.msra.mxu0 0
        %766 = vmatprep.subr.bf16.mxu0 0
        %767 = vmatpush1.bf16.msra.mxu0 %v751
        %768 = vmatprep.subr.bf16.mxu0 0
        %769 = vmatpush1.bf16.msra.mxu0 %v750
        %770 = vmatprep.subr.bf16.mxu0 0
        %771 = vmatpush2.bf16.msra.mxu0 0
        %772 = vmatprep.subr.bf16.mxu0 0
        %773 = vmatpush2.bf16.msra.mxu0 0
        %774 = vmatprep.subr.bf16.mxu0 0
        %775 = vmatpush2.bf16.msra.mxu0 0
        %776 = vmatprep.subr.bf16.mxu0 0
        %777 = vmatpush2.bf16.msra.mxu0 0
        %778 = vmatprep.subr.bf16.mxu0 0
        %779 = vmatpush2.bf16.msra.mxu0 0
        %780 = vmatprep.subr.bf16.mxu0 0
        %781 = vmatpush2.bf16.msra.mxu0 0
        %782 = vmatprep.subr.bf16.mxu0 0
        %783 = vmatpush2.bf16.msra.mxu0 0
        %784 = vmatprep.subr.bf16.mxu0 0
        %785 = vmatpush2.bf16.msra.mxu0 0
        %786 = vmatprep.mubr.bf16.mxu0 0
        %787 = vmatmul.mubr.bf16.gmra.mxu0 %v445
        %v788 = vpop.f32.mrf.mxu0
        %v789 = vadd.f32 %v740, %v788
        %v790 = vpop.f32.mrf.mxu0
        %v791 = vpop.f32.mrf.mxu0
        %v792 = vpop.f32.mrf.mxu0
        %793 = vdwg.mxu0
        %s794 = scalar_lea.vmem %s4, 16
        %v795 = vld [vmem:[%s794] sm:$0xf]
        %v796 = vld [vmem:[%s794 + $0x4] sm:$0xf]
        %v797 = vld [vmem:[%s794 + $0x8] sm:$0xf]
        %v798 = vld [vmem:[%s794 + $0xc] sm:$0xf]
        %s799 = scalar_lea.vmem %s7, 1
        %v800 = vld [vmem:[%s799] sm:$0x1]
        %v802 = vlaneseq
        %v803 = vshrl.u32 %v802, 7
        %v804 = vsub.s32 0, %v803
        %v805 = vrot.slane %v800, %v804
        %v811 = vunpack.c.l.b16 %v795
        %v812 = vunpack.c.l.b16 %v796
        %v813 = vunpack.c.l.b16 %v797
        %v814 = vunpack.c.l.b16 %v798
        %v815 = vpack.c.b16 %v812, %v811
        %v816 = vpack.c.b16 %v814, %v813
        %819 = vmatprep.subr.bf16.mxu0 0
        %820 = vmatpush1.bf16.msra.mxu0 0
        %821 = vmatprep.subr.bf16.mxu0 0
        %822 = vmatpush1.bf16.msra.mxu0 0
        %823 = vmatprep.subr.bf16.mxu0 0
        %824 = vmatpush1.bf16.msra.mxu0 0
        %825 = vmatprep.subr.bf16.mxu0 0
        %826 = vmatpush1.bf16.msra.mxu0 0
        %827 = vmatprep.subr.bf16.mxu0 0
        %828 = vmatpush1.bf16.msra.mxu0 0
        %829 = vmatprep.subr.bf16.mxu0 0
        %830 = vmatpush1.bf16.msra.mxu0 0
        %831 = vmatprep.subr.bf16.mxu0 0
        %832 = vmatpush1.bf16.msra.mxu0 %v816
        %833 = vmatprep.subr.bf16.mxu0 0
        %834 = vmatpush1.bf16.msra.mxu0 %v815
        %835 = vmatprep.subr.bf16.mxu0 0
        %836 = vmatpush2.bf16.msra.mxu0 0
        %837 = vmatprep.subr.bf16.mxu0 0
        %838 = vmatpush2.bf16.msra.mxu0 0
        %839 = vmatprep.subr.bf16.mxu0 0
        %840 = vmatpush2.bf16.msra.mxu0 0
        %841 = vmatprep.subr.bf16.mxu0 0
        %842 = vmatpush2.bf16.msra.mxu0 0
        %843 = vmatprep.subr.bf16.mxu0 0
        %844 = vmatpush2.bf16.msra.mxu0 0
        %845 = vmatprep.subr.bf16.mxu0 0
        %846 = vmatpush2.bf16.msra.mxu0 0
        %847 = vmatprep.subr.bf16.mxu0 0
        %848 = vmatpush2.bf16.msra.mxu0 0
        %849 = vmatprep.subr.bf16.mxu0 0
        %850 = vmatpush2.bf16.msra.mxu0 0
        %851 = vmatprep.mubr.bf16.mxu0 0
        %852 = vmatmul.mubr.bf16.gmra.mxu0 %v511
        %v853 = vpop.f32.mrf.mxu0
        %v854 = vadd.f32 %v805, %v853
        %v855 = vpop.f32.mrf.mxu0
        %v856 = vpop.f32.mrf.mxu0
        %v857 = vpop.f32.mrf.mxu0
        %858 = vdwg.mxu0
        %s859 = scalar_lea.vmem %s5, 16
        %v860 = vld [vmem:[%s859] sm:$0xf]
        %v861 = vld [vmem:[%s859 + $0x4] sm:$0xf]
        %v862 = vld [vmem:[%s859 + $0x8] sm:$0xf]
        %v863 = vld [vmem:[%s859 + $0xc] sm:$0xf]
        %s864 = scalar_lea.vmem %s8, 1
        %v865 = vld [vmem:[%s864] sm:$0x1]
        %v867 = vlaneseq
        %v868 = vshrl.u32 %v867, 7
        %v869 = vsub.s32 0, %v868
        %v870 = vrot.slane %v865, %v869
        %v876 = vunpack.c.l.b16 %v860
        %v877 = vunpack.c.l.b16 %v861
        %v878 = vunpack.c.l.b16 %v862
        %v879 = vunpack.c.l.b16 %v863
        %v880 = vpack.c.b16 %v877, %v876
        %v881 = vpack.c.b16 %v879, %v878
        %884 = vmatprep.subr.bf16.mxu0 0
        %885 = vmatpush1.bf16.msra.mxu0 0
        %886 = vmatprep.subr.bf16.mxu0 0
        %887 = vmatpush1.bf16.msra.mxu0 0
        %888 = vmatprep.subr.bf16.mxu0 0
        %889 = vmatpush1.bf16.msra.mxu0 0
        %890 = vmatprep.subr.bf16.mxu0 0
        %891 = vmatpush1.bf16.msra.mxu0 0
        %892 = vmatprep.subr.bf16.mxu0 0
        %893 = vmatpush1.bf16.msra.mxu0 0
        %894 = vmatprep.subr.bf16.mxu0 0
        %895 = vmatpush1.bf16.msra.mxu0 0
        %896 = vmatprep.subr.bf16.mxu0 0
        %897 = vmatpush1.bf16.msra.mxu0 %v881
        %898 = vmatprep.subr.bf16.mxu0 0
        %899 = vmatpush1.bf16.msra.mxu0 %v880
        %900 = vmatprep.subr.bf16.mxu0 0
        %901 = vmatpush2.bf16.msra.mxu0 0
        %902 = vmatprep.subr.bf16.mxu0 0
        %903 = vmatpush2.bf16.msra.mxu0 0
        %904 = vmatprep.subr.bf16.mxu0 0
        %905 = vmatpush2.bf16.msra.mxu0 0
        %906 = vmatprep.subr.bf16.mxu0 0
        %907 = vmatpush2.bf16.msra.mxu0 0
        %908 = vmatprep.subr.bf16.mxu0 0
        %909 = vmatpush2.bf16.msra.mxu0 0
        %910 = vmatprep.subr.bf16.mxu0 0
        %911 = vmatpush2.bf16.msra.mxu0 0
        %912 = vmatprep.subr.bf16.mxu0 0
        %913 = vmatpush2.bf16.msra.mxu0 0
        %914 = vmatprep.subr.bf16.mxu0 0
        %915 = vmatpush2.bf16.msra.mxu0 0
        %916 = vmatprep.mubr.bf16.mxu0 0
        %917 = vmatmul.mubr.bf16.gmra.mxu0 %v577
        %v918 = vpop.f32.mrf.mxu0
        %v919 = vadd.f32 %v870, %v918
        %v920 = vpop.f32.mrf.mxu0
        %v921 = vpop.f32.mrf.mxu0
        %v922 = vpop.f32.mrf.mxu0
        %923 = vdwg.mxu0
        %v924 = vpack.c.bf16 %v789, %v789
        %v925 = vpack.c.bf16 %v854, %v854
        %v927 = vsel %vm621, %v924, 0
        %v930 = vsel %vm621, %v925, 0
        %932 = vmatprep.subr.bf16.mxu0 0
        %933 = vmatpush1.bf16.xpose.msra.mxu0 0
        %934 = vmatprep.subr.bf16.mxu0 0
        %935 = vmatpush1.bf16.xpose.msra.mxu0 0
        %936 = vmatprep.subr.bf16.mxu0 0
        %937 = vmatpush1.bf16.xpose.msra.mxu0 0
        %938 = vmatprep.subr.bf16.mxu0 0
        %939 = vmatpush1.bf16.xpose.msra.mxu0 0
        %940 = vmatprep.subr.bf16.mxu0 0
        %941 = vmatpush1.bf16.xpose.msra.mxu0 0
        %942 = vmatprep.subr.bf16.mxu0 0
        %943 = vmatpush1.bf16.xpose.msra.mxu0 0
        %944 = vmatprep.subr.bf16.mxu0 0
        %945 = vmatpush1.bf16.xpose.msra.mxu0 0
        %946 = vmatprep.subr.bf16.mxu0 0
        %947 = vmatpush1.bf16.xpose.msra.mxu0 %v930
        %948 = vmatprep.subr.bf16.mxu0 0
        %949 = vmatpush2.bf16.xpose.msra.mxu0 0
        %950 = vmatprep.subr.bf16.mxu0 0
        %951 = vmatpush2.bf16.xpose.msra.mxu0 0
        %952 = vmatprep.subr.bf16.mxu0 0
        %953 = vmatpush2.bf16.xpose.msra.mxu0 0
        %954 = vmatprep.subr.bf16.mxu0 0
        %955 = vmatpush2.bf16.xpose.msra.mxu0 0
        %956 = vmatprep.subr.bf16.mxu0 0
        %957 = vmatpush2.bf16.xpose.msra.mxu0 0
        %958 = vmatprep.subr.bf16.mxu0 0
        %959 = vmatpush2.bf16.xpose.msra.mxu0 0
        %960 = vmatprep.subr.bf16.mxu0 0
        %961 = vmatpush2.bf16.xpose.msra.mxu0 0
        %962 = vmatprep.subr.bf16.mxu0 0
        %963 = vmatpush2.bf16.xpose.msra.mxu0 0
        %964 = vmatprep.mubr.bf16.mxu0 0
        %965 = vmatmul.mubr.bf16.gmra.mxu0 %v927
        %v966 = vpop.f32.mrf.mxu0
        %v967 = vadd.f32 0.0, %v966
        %v968 = vpop.f32.mrf.mxu0
        %v969 = vpop.f32.mrf.mxu0
        %v970 = vpop.f32.mrf.mxu0
        %971 = vdwg.mxu0
        %v972 = vsel %vm621, %v967, -inf
        %973 = vmax.xlane.f32.xlu0 %v972
        %v974 = vpop.xlane.xlu0 %973
        %v975 = vsub.f32 %v967, %v974
        %v976 = vmul.f32 %v975, 1.442695
        %v977 = vpow.pop %v976
        %v978 = vsel %vm621, %v977, 0.0
        %979 = vadd.xlane.f32.xlu0 %v978
        %v980 = vpop.xlane.xlu0 %979
        %v981 = vrcp.pop %v980
        %v982 = vmul.f32 %v977, %v981
        %v983 = vpack.c.bf16 %v982, %v982
        %v984 = vpack.c.bf16 %v919, %v919
        %v986 = vsel %vm621, %v983, 0
        %v989 = vsel %vm684, %v984, 0
        %991 = vmatprep.subr.bf16.mxu0 0
        %992 = vmatpush1.bf16.msra.mxu0 0
        %993 = vmatprep.subr.bf16.mxu0 0
        %994 = vmatpush1.bf16.msra.mxu0 0
        %995 = vmatprep.subr.bf16.mxu0 0
        %996 = vmatpush1.bf16.msra.mxu0 0
        %997 = vmatprep.subr.bf16.mxu0 0
        %998 = vmatpush1.bf16.msra.mxu0 0
        %999 = vmatprep.subr.bf16.mxu0 0
        %1000 = vmatpush1.bf16.msra.mxu0 0
        %1001 = vmatprep.subr.bf16.mxu0 0
        %1002 = vmatpush1.bf16.msra.mxu0 0
        %1003 = vmatprep.subr.bf16.mxu0 0
        %1004 = vmatpush1.bf16.msra.mxu0 0
        %1005 = vmatprep.subr.bf16.mxu0 0
        %1006 = vmatpush1.bf16.msra.mxu0 %v989
        %1007 = vmatprep.subr.bf16.mxu0 0
        %1008 = vmatpush2.bf16.msra.mxu0 0
        %1009 = vmatprep.subr.bf16.mxu0 0
        %1010 = vmatpush2.bf16.msra.mxu0 0
        %1011 = vmatprep.subr.bf16.mxu0 0
        %1012 = vmatpush2.bf16.msra.mxu0 0
        %1013 = vmatprep.subr.bf16.mxu0 0
        %1014 = vmatpush2.bf16.msra.mxu0 0
        %1015 = vmatprep.subr.bf16.mxu0 0
        %1016 = vmatpush2.bf16.msra.mxu0 0
        %1017 = vmatprep.subr.bf16.mxu0 0
        %1018 = vmatpush2.bf16.msra.mxu0 0
        %1019 = vmatprep.subr.bf16.mxu0 0
        %1020 = vmatpush2.bf16.msra.mxu0 0
        %1021 = vmatprep.subr.bf16.mxu0 0
        %1022 = vmatpush2.bf16.msra.mxu0 0
        %1023 = vmatprep.mubr.bf16.mxu0 0
        %1024 = vmatmul.mubr.bf16.gmra.mxu0 %v986
        %v1025 = vpop.f32.mrf.mxu0
        %v1026 = vadd.f32 0.0, %v1025
        %v1027 = vpop.f32.mrf.mxu0
        %v1028 = vpop.f32.mrf.mxu0
        %v1029 = vpop.f32.mrf.mxu0
        %1030 = vdwg.mxu0
        %1031 = vst.msk [vmem:[#allocation2 + $0x8] sm:$0xff] %vm621, %v1026
        %s1032 = scalar_lea.vmem %s3, 32
        %v1033 = vld [vmem:[%s1032] sm:$0xf]
        %v1034 = vld [vmem:[%s1032 + $0x4] sm:$0xf]
        %v1035 = vld [vmem:[%s1032 + $0x8] sm:$0xf]
        %v1036 = vld [vmem:[%s1032 + $0xc] sm:$0xf]
        %s1037 = scalar_lea.vmem %s6, 2
        %v1038 = vld [vmem:[%s1037] sm:$0x1]
        %v1040 = vlaneseq
        %v1041 = vshrl.u32 %v1040, 7
        %v1042 = vsub.s32 0, %v1041
        %v1043 = vrot.slane %v1038, %v1042
        %v1049 = vunpack.c.l.b16 %v1033
        %v1050 = vunpack.c.l.b16 %v1034
        %v1051 = vunpack.c.l.b16 %v1035
        %v1052 = vunpack.c.l.b16 %v1036
        %v1053 = vpack.c.b16 %v1050, %v1049
        %v1054 = vpack.c.b16 %v1052, %v1051
        %1057 = vmatprep.subr.bf16.mxu0 0
        %1058 = vmatpush1.bf16.msra.mxu0 0
        %1059 = vmatprep.subr.bf16.mxu0 0
        %1060 = vmatpush1.bf16.msra.mxu0 0
        %1061 = vmatprep.subr.bf16.mxu0 0
        %1062 = vmatpush1.bf16.msra.mxu0 0
        %1063 = vmatprep.subr.bf16.mxu0 0
        %1064 = vmatpush1.bf16.msra.mxu0 0
        %1065 = vmatprep.subr.bf16.mxu0 0
        %1066 = vmatpush1.bf16.msra.mxu0 0
        %1067 = vmatprep.subr.bf16.mxu0 0
        %1068 = vmatpush1.bf16.msra.mxu0 0
        %1069 = vmatprep.subr.bf16.mxu0 0
        %1070 = vmatpush1.bf16.msra.mxu0 %v1054
        %1071 = vmatprep.subr.bf16.mxu0 0
        %1072 = vmatpush1.bf16.msra.mxu0 %v1053
        %1073 = vmatprep.subr.bf16.mxu0 0
        %1074 = vmatpush2.bf16.msra.mxu0 0
        %1075 = vmatprep.subr.bf16.mxu0 0
        %1076 = vmatpush2.bf16.msra.mxu0 0
        %1077 = vmatprep.subr.bf16.mxu0 0
        %1078 = vmatpush2.bf16.msra.mxu0 0
        %1079 = vmatprep.subr.bf16.mxu0 0
        %1080 = vmatpush2.bf16.msra.mxu0 0
        %1081 = vmatprep.subr.bf16.mxu0 0
        %1082 = vmatpush2.bf16.msra.mxu0 0
        %1083 = vmatprep.subr.bf16.mxu0 0
        %1084 = vmatpush2.bf16.msra.mxu0 0
        %1085 = vmatprep.subr.bf16.mxu0 0
        %1086 = vmatpush2.bf16.msra.mxu0 0
        %1087 = vmatprep.subr.bf16.mxu0 0
        %1088 = vmatpush2.bf16.msra.mxu0 0
        %1089 = vmatprep.mubr.bf16.mxu0 0
        %1090 = vmatmul.mubr.bf16.gmra.mxu0 %v445
        %v1091 = vpop.f32.mrf.mxu0
        %v1092 = vadd.f32 %v1043, %v1091
        %v1093 = vpop.f32.mrf.mxu0
        %v1094 = vpop.f32.mrf.mxu0
        %v1095 = vpop.f32.mrf.mxu0
        %1096 = vdwg.mxu0
        %s1097 = scalar_lea.vmem %s4, 32
        %v1098 = vld [vmem:[%s1097] sm:$0xf]
        %v1099 = vld [vmem:[%s1097 + $0x4] sm:$0xf]
        %v1100 = vld [vmem:[%s1097 + $0x8] sm:$0xf]
        %v1101 = vld [vmem:[%s1097 + $0xc] sm:$0xf]
        %s1102 = scalar_lea.vmem %s7, 2
        %v1103 = vld [vmem:[%s1102] sm:$0x1]
        %v1105 = vlaneseq
        %v1106 = vshrl.u32 %v1105, 7
        %v1107 = vsub.s32 0, %v1106
        %v1108 = vrot.slane %v1103, %v1107
        %v1114 = vunpack.c.l.b16 %v1098
        %v1115 = vunpack.c.l.b16 %v1099
        %v1116 = vunpack.c.l.b16 %v1100
        %v1117 = vunpack.c.l.b16 %v1101
        %v1118 = vpack.c.b16 %v1115, %v1114
        %v1119 = vpack.c.b16 %v1117, %v1116
        %1122 = vmatprep.subr.bf16.mxu0 0
        %1123 = vmatpush1.bf16.msra.mxu0 0
        %1124 = vmatprep.subr.bf16.mxu0 0
        %1125 = vmatpush1.bf16.msra.mxu0 0
        %1126 = vmatprep.subr.bf16.mxu0 0
        %1127 = vmatpush1.bf16.msra.mxu0 0
        %1128 = vmatprep.subr.bf16.mxu0 0
        %1129 = vmatpush1.bf16.msra.mxu0 0
        %1130 = vmatprep.subr.bf16.mxu0 0
        %1131 = vmatpush1.bf16.msra.mxu0 0
        %1132 = vmatprep.subr.bf16.mxu0 0
        %1133 = vmatpush1.bf16.msra.mxu0 0
        %1134 = vmatprep.subr.bf16.mxu0 0
        %1135 = vmatpush1.bf16.msra.mxu0 %v1119
        %1136 = vmatprep.subr.bf16.mxu0 0
        %1137 = vmatpush1.bf16.msra.mxu0 %v1118
        %1138 = vmatprep.subr.bf16.mxu0 0
        %1139 = vmatpush2.bf16.msra.mxu0 0
        %1140 = vmatprep.subr.bf16.mxu0 0
        %1141 = vmatpush2.bf16.msra.mxu0 0
        %1142 = vmatprep.subr.bf16.mxu0 0
        %1143 = vmatpush2.bf16.msra.mxu0 0
        %1144 = vmatprep.subr.bf16.mxu0 0
        %1145 = vmatpush2.bf16.msra.mxu0 0
        %1146 = vmatprep.subr.bf16.mxu0 0
        %1147 = vmatpush2.bf16.msra.mxu0 0
        %1148 = vmatprep.subr.bf16.mxu0 0
        %1149 = vmatpush2.bf16.msra.mxu0 0
        %1150 = vmatprep.subr.bf16.mxu0 0
        %1151 = vmatpush2.bf16.msra.mxu0 0
        %1152 = vmatprep.subr.bf16.mxu0 0
        %1153 = vmatpush2.bf16.msra.mxu0 0
        %1154 = vmatprep.mubr.bf16.mxu0 0
        %1155 = vmatmul.mubr.bf16.gmra.mxu0 %v511
        %v1156 = vpop.f32.mrf.mxu0
        %v1157 = vadd.f32 %v1108, %v1156
        %v1158 = vpop.f32.mrf.mxu0
        %v1159 = vpop.f32.mrf.mxu0
        %v1160 = vpop.f32.mrf.mxu0
        %1161 = vdwg.mxu0
        %s1162 = scalar_lea.vmem %s5, 32
        %v1163 = vld [vmem:[%s1162] sm:$0xf]
        %v1164 = vld [vmem:[%s1162 + $0x4] sm:$0xf]
        %v1165 = vld [vmem:[%s1162 + $0x8] sm:$0xf]
        %v1166 = vld [vmem:[%s1162 + $0xc] sm:$0xf]
        %s1167 = scalar_lea.vmem %s8, 2
        %v1168 = vld [vmem:[%s1167] sm:$0x1]
        %v1170 = vlaneseq
        %v1171 = vshrl.u32 %v1170, 7
        %v1172 = vsub.s32 0, %v1171
        %v1173 = vrot.slane %v1168, %v1172
        %v1179 = vunpack.c.l.b16 %v1163
        %v1180 = vunpack.c.l.b16 %v1164
        %v1181 = vunpack.c.l.b16 %v1165
        %v1182 = vunpack.c.l.b16 %v1166
        %v1183 = vpack.c.b16 %v1180, %v1179
        %v1184 = vpack.c.b16 %v1182, %v1181
        %1187 = vmatprep.subr.bf16.mxu0 0
        %1188 = vmatpush1.bf16.msra.mxu0 0
        %1189 = vmatprep.subr.bf16.mxu0 0
        %1190 = vmatpush1.bf16.msra.mxu0 0
        %1191 = vmatprep.subr.bf16.mxu0 0
        %1192 = vmatpush1.bf16.msra.mxu0 0
        %1193 = vmatprep.subr.bf16.mxu0 0
        %1194 = vmatpush1.bf16.msra.mxu0 0
        %1195 = vmatprep.subr.bf16.mxu0 0
        %1196 = vmatpush1.bf16.msra.mxu0 0
        %1197 = vmatprep.subr.bf16.mxu0 0
        %1198 = vmatpush1.bf16.msra.mxu0 0
        %1199 = vmatprep.subr.bf16.mxu0 0
        %1200 = vmatpush1.bf16.msra.mxu0 %v1184
        %1201 = vmatprep.subr.bf16.mxu0 0
        %1202 = vmatpush1.bf16.msra.mxu0 %v1183
        %1203 = vmatprep.subr.bf16.mxu0 0
        %1204 = vmatpush2.bf16.msra.mxu0 0
        %1205 = vmatprep.subr.bf16.mxu0 0
        %1206 = vmatpush2.bf16.msra.mxu0 0
        %1207 = vmatprep.subr.bf16.mxu0 0
        %1208 = vmatpush2.bf16.msra.mxu0 0
        %1209 = vmatprep.subr.bf16.mxu0 0
        %1210 = vmatpush2.bf16.msra.mxu0 0
        %1211 = vmatprep.subr.bf16.mxu0 0
        %1212 = vmatpush2.bf16.msra.mxu0 0
        %1213 = vmatprep.subr.bf16.mxu0 0
        %1214 = vmatpush2.bf16.msra.mxu0 0
        %1215 = vmatprep.subr.bf16.mxu0 0
        %1216 = vmatpush2.bf16.msra.mxu0 0
        %1217 = vmatprep.subr.bf16.mxu0 0
        %1218 = vmatpush2.bf16.msra.mxu0 0
        %1219 = vmatprep.mubr.bf16.mxu0 0
        %1220 = vmatmul.mubr.bf16.gmra.mxu0 %v577
        %v1221 = vpop.f32.mrf.mxu0
        %v1222 = vadd.f32 %v1173, %v1221
        %v1223 = vpop.f32.mrf.mxu0
        %v1224 = vpop.f32.mrf.mxu0
        %v1225 = vpop.f32.mrf.mxu0
        %1226 = vdwg.mxu0
        %v1227 = vpack.c.bf16 %v1092, %v1092
        %v1228 = vpack.c.bf16 %v1157, %v1157
        %v1230 = vsel %vm621, %v1227, 0
        %v1233 = vsel %vm621, %v1228, 0
        %1235 = vmatprep.subr.bf16.mxu0 0
        %1236 = vmatpush1.bf16.xpose.msra.mxu0 0
        %1237 = vmatprep.subr.bf16.mxu0 0
        %1238 = vmatpush1.bf16.xpose.msra.mxu0 0
        %1239 = vmatprep.subr.bf16.mxu0 0
        %1240 = vmatpush1.bf16.xpose.msra.mxu0 0
        %1241 = vmatprep.subr.bf16.mxu0 0
        %1242 = vmatpush1.bf16.xpose.msra.mxu0 0
        %1243 = vmatprep.subr.bf16.mxu0 0
        %1244 = vmatpush1.bf16.xpose.msra.mxu0 0
        %1245 = vmatprep.subr.bf16.mxu0 0
        %1246 = vmatpush1.bf16.xpose.msra.mxu0 0
        %1247 = vmatprep.subr.bf16.mxu0 0
        %1248 = vmatpush1.bf16.xpose.msra.mxu0 0
        %1249 = vmatprep.subr.bf16.mxu0 0
        %1250 = vmatpush1.bf16.xpose.msra.mxu0 %v1233
        %1251 = vmatprep.subr.bf16.mxu0 0
        %1252 = vmatpush2.bf16.xpose.msra.mxu0 0
        %1253 = vmatprep.subr.bf16.mxu0 0
        %1254 = vmatpush2.bf16.xpose.msra.mxu0 0
        %1255 = vmatprep.subr.bf16.mxu0 0
        %1256 = vmatpush2.bf16.xpose.msra.mxu0 0
        %1257 = vmatprep.subr.bf16.mxu0 0
        %1258 = vmatpush2.bf16.xpose.msra.mxu0 0
        %1259 = vmatprep.subr.bf16.mxu0 0
        %1260 = vmatpush2.bf16.xpose.msra.mxu0 0
        %1261 = vmatprep.subr.bf16.mxu0 0
        %1262 = vmatpush2.bf16.xpose.msra.mxu0 0
        %1263 = vmatprep.subr.bf16.mxu0 0
        %1264 = vmatpush2.bf16.xpose.msra.mxu0 0
        %1265 = vmatprep.subr.bf16.mxu0 0
        %1266 = vmatpush2.bf16.xpose.msra.mxu0 0
        %1267 = vmatprep.mubr.bf16.mxu0 0
        %1268 = vmatmul.mubr.bf16.gmra.mxu0 %v1230
        %v1269 = vpop.f32.mrf.mxu0
        %v1270 = vadd.f32 0.0, %v1269
        %v1271 = vpop.f32.mrf.mxu0
        %v1272 = vpop.f32.mrf.mxu0
        %v1273 = vpop.f32.mrf.mxu0
        %1274 = vdwg.mxu0
        %v1275 = vsel %vm621, %v1270, -inf
        %1276 = vmax.xlane.f32.xlu0 %v1275
        %v1277 = vpop.xlane.xlu0 %1276
        %v1278 = vsub.f32 %v1270, %v1277
        %v1279 = vmul.f32 %v1278, 1.442695
        %v1280 = vpow.pop %v1279
        %v1281 = vsel %vm621, %v1280, 0.0
        %1282 = vadd.xlane.f32.xlu0 %v1281
        %v1283 = vpop.xlane.xlu0 %1282
        %v1284 = vrcp.pop %v1283
        %v1285 = vmul.f32 %v1280, %v1284
        %v1286 = vpack.c.bf16 %v1285, %v1285
        %v1287 = vpack.c.bf16 %v1222, %v1222
        %v1289 = vsel %vm621, %v1286, 0
        %v1292 = vsel %vm684, %v1287, 0
        %1294 = vmatprep.subr.bf16.mxu0 0
        %1295 = vmatpush1.bf16.msra.mxu0 0
        %1296 = vmatprep.subr.bf16.mxu0 0
        %1297 = vmatpush1.bf16.msra.mxu0 0
        %1298 = vmatprep.subr.bf16.mxu0 0
        %1299 = vmatpush1.bf16.msra.mxu0 0
        %1300 = vmatprep.subr.bf16.mxu0 0
        %1301 = vmatpush1.bf16.msra.mxu0 0
        %1302 = vmatprep.subr.bf16.mxu0 0
        %1303 = vmatpush1.bf16.msra.mxu0 0
        %1304 = vmatprep.subr.bf16.mxu0 0
        %1305 = vmatpush1.bf16.msra.mxu0 0
        %1306 = vmatprep.subr.bf16.mxu0 0
        %1307 = vmatpush1.bf16.msra.mxu0 0
        %1308 = vmatprep.subr.bf16.mxu0 0
        %1309 = vmatpush1.bf16.msra.mxu0 %v1292
        %1310 = vmatprep.subr.bf16.mxu0 0
        %1311 = vmatpush2.bf16.msra.mxu0 0
        %1312 = vmatprep.subr.bf16.mxu0 0
        %1313 = vmatpush2.bf16.msra.mxu0 0
        %1314 = vmatprep.subr.bf16.mxu0 0
        %1315 = vmatpush2.bf16.msra.mxu0 0
        %1316 = vmatprep.subr.bf16.mxu0 0
        %1317 = vmatpush2.bf16.msra.mxu0 0
        %1318 = vmatprep.subr.bf16.mxu0 0
        %1319 = vmatpush2.bf16.msra.mxu0 0
        %1320 = vmatprep.subr.bf16.mxu0 0
        %1321 = vmatpush2.bf16.msra.mxu0 0
        %1322 = vmatprep.subr.bf16.mxu0 0
        %1323 = vmatpush2.bf16.msra.mxu0 0
        %1324 = vmatprep.subr.bf16.mxu0 0
        %1325 = vmatpush2.bf16.msra.mxu0 0
        %1326 = vmatprep.mubr.bf16.mxu0 0
        %1327 = vmatmul.mubr.bf16.gmra.mxu0 %v1289
        %v1328 = vpop.f32.mrf.mxu0
        %v1329 = vadd.f32 0.0, %v1328
        %v1330 = vpop.f32.mrf.mxu0
        %v1331 = vpop.f32.mrf.mxu0
        %v1332 = vpop.f32.mrf.mxu0
        %1333 = vdwg.mxu0
        %1334 = vst.msk [vmem:[#allocation2 + $0x10] sm:$0xff] %vm621, %v1329
        %s1335 = scalar_lea.vmem %s3, 48
        %v1336 = vld [vmem:[%s1335] sm:$0xf]
        %v1337 = vld [vmem:[%s1335 + $0x4] sm:$0xf]
        %v1338 = vld [vmem:[%s1335 + $0x8] sm:$0xf]
        %v1339 = vld [vmem:[%s1335 + $0xc] sm:$0xf]
        %s1340 = scalar_lea.vmem %s6, 3
        %v1341 = vld [vmem:[%s1340] sm:$0x1]
        %v1343 = vlaneseq
        %v1344 = vshrl.u32 %v1343, 7
        %v1345 = vsub.s32 0, %v1344
        %v1346 = vrot.slane %v1341, %v1345
        %v1352 = vunpack.c.l.b16 %v1336
        %v1353 = vunpack.c.l.b16 %v1337
        %v1354 = vunpack.c.l.b16 %v1338
        %v1355 = vunpack.c.l.b16 %v1339
        %v1356 = vpack.c.b16 %v1353, %v1352
        %v1357 = vpack.c.b16 %v1355, %v1354
        %1360 = vmatprep.subr.bf16.mxu0 0
        %1361 = vmatpush1.bf16.msra.mxu0 0
        %1362 = vmatprep.subr.bf16.mxu0 0
        %1363 = vmatpush1.bf16.msra.mxu0 0
        %1364 = vmatprep.subr.bf16.mxu0 0
        %1365 = vmatpush1.bf16.msra.mxu0 0
        %1366 = vmatprep.subr.bf16.mxu0 0
        %1367 = vmatpush1.bf16.msra.mxu0 0
        %1368 = vmatprep.subr.bf16.mxu0 0
        %1369 = vmatpush1.bf16.msra.mxu0 0
        %1370 = vmatprep.subr.bf16.mxu0 0
        %1371 = vmatpush1.bf16.msra.mxu0 0
        %1372 = vmatprep.subr.bf16.mxu0 0
        %1373 = vmatpush1.bf16.msra.mxu0 %v1357
        %1374 = vmatprep.subr.bf16.mxu0 0
        %1375 = vmatpush1.bf16.msra.mxu0 %v1356
        %1376 = vmatprep.subr.bf16.mxu0 0
        %1377 = vmatpush2.bf16.msra.mxu0 0
        %1378 = vmatprep.subr.bf16.mxu0 0
        %1379 = vmatpush2.bf16.msra.mxu0 0
        %1380 = vmatprep.subr.bf16.mxu0 0
        %1381 = vmatpush2.bf16.msra.mxu0 0
        %1382 = vmatprep.subr.bf16.mxu0 0
        %1383 = vmatpush2.bf16.msra.mxu0 0
        %1384 = vmatprep.subr.bf16.mxu0 0
        %1385 = vmatpush2.bf16.msra.mxu0 0
        %1386 = vmatprep.subr.bf16.mxu0 0
        %1387 = vmatpush2.bf16.msra.mxu0 0
        %1388 = vmatprep.subr.bf16.mxu0 0
        %1389 = vmatpush2.bf16.msra.mxu0 0
        %1390 = vmatprep.subr.bf16.mxu0 0
        %1391 = vmatpush2.bf16.msra.mxu0 0
        %1392 = vmatprep.mubr.bf16.mxu0 0
        %1393 = vmatmul.mubr.bf16.gmra.mxu0 %v445
        %v1394 = vpop.f32.mrf.mxu0
        %v1395 = vadd.f32 %v1346, %v1394
        %v1396 = vpop.f32.mrf.mxu0
        %v1397 = vpop.f32.mrf.mxu0
        %v1398 = vpop.f32.mrf.mxu0
        %1399 = vdwg.mxu0
        %s1400 = scalar_lea.vmem %s4, 48
        %v1401 = vld [vmem:[%s1400] sm:$0xf]
        %v1402 = vld [vmem:[%s1400 + $0x4] sm:$0xf]
        %v1403 = vld [vmem:[%s1400 + $0x8] sm:$0xf]
        %v1404 = vld [vmem:[%s1400 + $0xc] sm:$0xf]
        %s1405 = scalar_lea.vmem %s7, 3
        %v1406 = vld [vmem:[%s1405] sm:$0x1]
        %v1408 = vlaneseq
        %v1409 = vshrl.u32 %v1408, 7
        %v1410 = vsub.s32 0, %v1409
        %v1411 = vrot.slane %v1406, %v1410
        %v1417 = vunpack.c.l.b16 %v1401
        %v1418 = vunpack.c.l.b16 %v1402
        %v1419 = vunpack.c.l.b16 %v1403
        %v1420 = vunpack.c.l.b16 %v1404
        %v1421 = vpack.c.b16 %v1418, %v1417
        %v1422 = vpack.c.b16 %v1420, %v1419
        %1425 = vmatprep.subr.bf16.mxu0 0
        %1426 = vmatpush1.bf16.msra.mxu0 0
        %1427 = vmatprep.subr.bf16.mxu0 0
        %1428 = vmatpush1.bf16.msra.mxu0 0
        %1429 = vmatprep.subr.bf16.mxu0 0
        %1430 = vmatpush1.bf16.msra.mxu0 0
        %1431 = vmatprep.subr.bf16.mxu0 0
        %1432 = vmatpush1.bf16.msra.mxu0 0
        %1433 = vmatprep.subr.bf16.mxu0 0
        %1434 = vmatpush1.bf16.msra.mxu0 0
        %1435 = vmatprep.subr.bf16.mxu0 0
        %1436 = vmatpush1.bf16.msra.mxu0 0
        %1437 = vmatprep.subr.bf16.mxu0 0
        %1438 = vmatpush1.bf16.msra.mxu0 %v1422
        %1439 = vmatprep.subr.bf16.mxu0 0
        %1440 = vmatpush1.bf16.msra.mxu0 %v1421
        %1441 = vmatprep.subr.bf16.mxu0 0
        %1442 = vmatpush2.bf16.msra.mxu0 0
        %1443 = vmatprep.subr.bf16.mxu0 0
        %1444 = vmatpush2.bf16.msra.mxu0 0
        %1445 = vmatprep.subr.bf16.mxu0 0
        %1446 = vmatpush2.bf16.msra.mxu0 0
        %1447 = vmatprep.subr.bf16.mxu0 0
        %1448 = vmatpush2.bf16.msra.mxu0 0
        %1449 = vmatprep.subr.bf16.mxu0 0
        %1450 = vmatpush2.bf16.msra.mxu0 0
        %1451 = vmatprep.subr.bf16.mxu0 0
        %1452 = vmatpush2.bf16.msra.mxu0 0
        %1453 = vmatprep.subr.bf16.mxu0 0
        %1454 = vmatpush2.bf16.msra.mxu0 0
        %1455 = vmatprep.subr.bf16.mxu0 0
        %1456 = vmatpush2.bf16.msra.mxu0 0
        %1457 = vmatprep.mubr.bf16.mxu0 0
        %1458 = vmatmul.mubr.bf16.gmra.mxu0 %v511
        %v1459 = vpop.f32.mrf.mxu0
        %v1460 = vadd.f32 %v1411, %v1459
        %v1461 = vpop.f32.mrf.mxu0
        %v1462 = vpop.f32.mrf.mxu0
        %v1463 = vpop.f32.mrf.mxu0
        %1464 = vdwg.mxu0
        %s1465 = scalar_lea.vmem %s5, 48
        %v1466 = vld [vmem:[%s1465] sm:$0xf]
        %v1467 = vld [vmem:[%s1465 + $0x4] sm:$0xf]
        %v1468 = vld [vmem:[%s1465 + $0x8] sm:$0xf]
        %v1469 = vld [vmem:[%s1465 + $0xc] sm:$0xf]
        %s1470 = scalar_lea.vmem %s8, 3
        %v1471 = vld [vmem:[%s1470] sm:$0x1]
        %v1473 = vlaneseq
        %v1474 = vshrl.u32 %v1473, 7
        %v1475 = vsub.s32 0, %v1474
        %v1476 = vrot.slane %v1471, %v1475
        %v1482 = vunpack.c.l.b16 %v1466
        %v1483 = vunpack.c.l.b16 %v1467
        %v1484 = vunpack.c.l.b16 %v1468
        %v1485 = vunpack.c.l.b16 %v1469
        %v1486 = vpack.c.b16 %v1483, %v1482
        %v1487 = vpack.c.b16 %v1485, %v1484
        %1490 = vmatprep.subr.bf16.mxu0 0
        %1491 = vmatpush1.bf16.msra.mxu0 0
        %1492 = vmatprep.subr.bf16.mxu0 0
        %1493 = vmatpush1.bf16.msra.mxu0 0
        %1494 = vmatprep.subr.bf16.mxu0 0
        %1495 = vmatpush1.bf16.msra.mxu0 0
        %1496 = vmatprep.subr.bf16.mxu0 0
        %1497 = vmatpush1.bf16.msra.mxu0 0
        %1498 = vmatprep.subr.bf16.mxu0 0
        %1499 = vmatpush1.bf16.msra.mxu0 0
        %1500 = vmatprep.subr.bf16.mxu0 0
        %1501 = vmatpush1.bf16.msra.mxu0 0
        %1502 = vmatprep.subr.bf16.mxu0 0
        %1503 = vmatpush1.bf16.msra.mxu0 %v1487
        %1504 = vmatprep.subr.bf16.mxu0 0
        %1505 = vmatpush1.bf16.msra.mxu0 %v1486
        %1506 = vmatprep.subr.bf16.mxu0 0
        %1507 = vmatpush2.bf16.msra.mxu0 0
        %1508 = vmatprep.subr.bf16.mxu0 0
        %1509 = vmatpush2.bf16.msra.mxu0 0
        %1510 = vmatprep.subr.bf16.mxu0 0
        %1511 = vmatpush2.bf16.msra.mxu0 0
        %1512 = vmatprep.subr.bf16.mxu0 0
        %1513 = vmatpush2.bf16.msra.mxu0 0
        %1514 = vmatprep.subr.bf16.mxu0 0
        %1515 = vmatpush2.bf16.msra.mxu0 0
        %1516 = vmatprep.subr.bf16.mxu0 0
        %1517 = vmatpush2.bf16.msra.mxu0 0
        %1518 = vmatprep.subr.bf16.mxu0 0
        %1519 = vmatpush2.bf16.msra.mxu0 0
        %1520 = vmatprep.subr.bf16.mxu0 0
        %1521 = vmatpush2.bf16.msra.mxu0 0
        %1522 = vmatprep.mubr.bf16.mxu0 0
        %1523 = vmatmul.mubr.bf16.gmra.mxu0 %v577
        %v1524 = vpop.f32.mrf.mxu0
        %v1525 = vadd.f32 %v1476, %v1524
        %v1526 = vpop.f32.mrf.mxu0
        %v1527 = vpop.f32.mrf.mxu0
        %v1528 = vpop.f32.mrf.mxu0
        %1529 = vdwg.mxu0
        %v1530 = vpack.c.bf16 %v1395, %v1395
        %v1531 = vpack.c.bf16 %v1460, %v1460
        %v1533 = vsel %vm621, %v1530, 0
        %v1536 = vsel %vm621, %v1531, 0
        %1538 = vmatprep.subr.bf16.mxu0 0
        %1539 = vmatpush1.bf16.xpose.msra.mxu0 0
        %1540 = vmatprep.subr.bf16.mxu0 0
        %1541 = vmatpush1.bf16.xpose.msra.mxu0 0
        %1542 = vmatprep.subr.bf16.mxu0 0
        %1543 = vmatpush1.bf16.xpose.msra.mxu0 0
        %1544 = vmatprep.subr.bf16.mxu0 0
        %1545 = vmatpush1.bf16.xpose.msra.mxu0 0
        %1546 = vmatprep.subr.bf16.mxu0 0
        %1547 = vmatpush1.bf16.xpose.msra.mxu0 0
        %1548 = vmatprep.subr.bf16.mxu0 0
        %1549 = vmatpush1.bf16.xpose.msra.mxu0 0
        %1550 = vmatprep.subr.bf16.mxu0 0
        %1551 = vmatpush1.bf16.xpose.msra.mxu0 0
        %1552 = vmatprep.subr.bf16.mxu0 0
        %1553 = vmatpush1.bf16.xpose.msra.mxu0 %v1536
        %1554 = vmatprep.subr.bf16.mxu0 0
        %1555 = vmatpush2.bf16.xpose.msra.mxu0 0
        %1556 = vmatprep.subr.bf16.mxu0 0
        %1557 = vmatpush2.bf16.xpose.msra.mxu0 0
        %1558 = vmatprep.subr.bf16.mxu0 0
        %1559 = vmatpush2.bf16.xpose.msra.mxu0 0
        %1560 = vmatprep.subr.bf16.mxu0 0
        %1561 = vmatpush2.bf16.xpose.msra.mxu0 0
        %1562 = vmatprep.subr.bf16.mxu0 0
        %1563 = vmatpush2.bf16.xpose.msra.mxu0 0
        %1564 = vmatprep.subr.bf16.mxu0 0
        %1565 = vmatpush2.bf16.xpose.msra.mxu0 0
        %1566 = vmatprep.subr.bf16.mxu0 0
        %1567 = vmatpush2.bf16.xpose.msra.mxu0 0
        %1568 = vmatprep.subr.bf16.mxu0 0
        %1569 = vmatpush2.bf16.xpose.msra.mxu0 0
        %1570 = vmatprep.mubr.bf16.mxu0 0
        %1571 = vmatmul.mubr.bf16.gmra.mxu0 %v1533
        %v1572 = vpop.f32.mrf.mxu0
        %v1573 = vadd.f32 0.0, %v1572
        %v1574 = vpop.f32.mrf.mxu0
        %v1575 = vpop.f32.mrf.mxu0
        %v1576 = vpop.f32.mrf.mxu0
        %1577 = vdwg.mxu0
        %v1578 = vsel %vm621, %v1573, -inf
        %1579 = vmax.xlane.f32.xlu0 %v1578
        %v1580 = vpop.xlane.xlu0 %1579
        %v1581 = vsub.f32 %v1573, %v1580
        %v1582 = vmul.f32 %v1581, 1.442695
        %v1583 = vpow.pop %v1582
        %v1584 = vsel %vm621, %v1583, 0.0
        %1585 = vadd.xlane.f32.xlu0 %v1584
        %v1586 = vpop.xlane.xlu0 %1585
        %v1587 = vrcp.pop %v1586
        %v1588 = vmul.f32 %v1583, %v1587
        %v1589 = vpack.c.bf16 %v1588, %v1588
        %v1590 = vpack.c.bf16 %v1525, %v1525
        %v1592 = vsel %vm621, %v1589, 0
        %v1595 = vsel %vm684, %v1590, 0
        %1597 = vmatprep.subr.bf16.mxu0 0
        %1598 = vmatpush1.bf16.msra.mxu0 0
        %1599 = vmatprep.subr.bf16.mxu0 0
        %1600 = vmatpush1.bf16.msra.mxu0 0
        %1601 = vmatprep.subr.bf16.mxu0 0
        %1602 = vmatpush1.bf16.msra.mxu0 0
        %1603 = vmatprep.subr.bf16.mxu0 0
        %1604 = vmatpush1.bf16.msra.mxu0 0
        %1605 = vmatprep.subr.bf16.mxu0 0
        %1606 = vmatpush1.bf16.msra.mxu0 0
        %1607 = vmatprep.subr.bf16.mxu0 0
        %1608 = vmatpush1.bf16.msra.mxu0 0
        %1609 = vmatprep.subr.bf16.mxu0 0
        %1610 = vmatpush1.bf16.msra.mxu0 0
        %1611 = vmatprep.subr.bf16.mxu0 0
        %1612 = vmatpush1.bf16.msra.mxu0 %v1595
        %1613 = vmatprep.subr.bf16.mxu0 0
        %1614 = vmatpush2.bf16.msra.mxu0 0
        %1615 = vmatprep.subr.bf16.mxu0 0
        %1616 = vmatpush2.bf16.msra.mxu0 0
        %1617 = vmatprep.subr.bf16.mxu0 0
        %1618 = vmatpush2.bf16.msra.mxu0 0
        %1619 = vmatprep.subr.bf16.mxu0 0
        %1620 = vmatpush2.bf16.msra.mxu0 0
        %1621 = vmatprep.subr.bf16.mxu0 0
        %1622 = vmatpush2.bf16.msra.mxu0 0
        %1623 = vmatprep.subr.bf16.mxu0 0
        %1624 = vmatpush2.bf16.msra.mxu0 0
        %1625 = vmatprep.subr.bf16.mxu0 0
        %1626 = vmatpush2.bf16.msra.mxu0 0
        %1627 = vmatprep.subr.bf16.mxu0 0
        %1628 = vmatpush2.bf16.msra.mxu0 0
        %1629 = vmatprep.mubr.bf16.mxu0 0
        %1630 = vmatmul.mubr.bf16.gmra.mxu0 %v1592
        %v1631 = vpop.f32.mrf.mxu0
        %v1632 = vadd.f32 0.0, %v1631
        %v1633 = vpop.f32.mrf.mxu0
        %v1634 = vpop.f32.mrf.mxu0
        %v1635 = vpop.f32.mrf.mxu0
        %1636 = vdwg.mxu0
        %1637 = vst.msk [vmem:[#allocation2 + $0x18] sm:$0xff] %vm621, %v1632
        %v1638 = vld [vmem:[#allocation2] ss:$4 sm:$0xff]
        %v1639 = vpack.c.bf16 %v1638, %v1638
        %v1640 = vld [vmem:[%s9] sm:$0xf]
        %s1641 = scalar_lea.vmem [#allocation2], 1
        %v1642 = vld [vmem:[%s1641] ss:$4 sm:$0xff]
        %v1643 = vpack.c.bf16 %v1642, %v1642
        %s1644 = scalar_lea.vmem %s9, 4
        %v1645 = vld [vmem:[%s1644] sm:$0xf]
        %v1647 = vsel %vm621, %v1643, 0
        %v1650 = vsel %vm684, %v1645, 0
        %1652 = vmatprep.subr.bf16.mxu0 0
        %1653 = vmatpush1.bf16.msra.mxu0 0
        %1654 = vmatprep.subr.bf16.mxu0 0
        %1655 = vmatpush1.bf16.msra.mxu0 0
        %1656 = vmatprep.subr.bf16.mxu0 0
        %1657 = vmatpush1.bf16.msra.mxu0 0
        %1658 = vmatprep.subr.bf16.mxu0 0
        %1659 = vmatpush1.bf16.msra.mxu0 0
        %1660 = vmatprep.subr.bf16.mxu0 0
        %1661 = vmatpush1.bf16.msra.mxu0 0
        %1662 = vmatprep.subr.bf16.mxu0 0
        %1663 = vmatpush1.bf16.msra.mxu0 0
        %1664 = vmatprep.subr.bf16.mxu0 0
        %1665 = vmatpush1.bf16.msra.mxu0 0
        %1666 = vmatprep.subr.bf16.mxu0 0
        %1667 = vmatpush1.bf16.msra.mxu0 %v1650
        %1668 = vmatprep.subr.bf16.mxu0 0
        %1669 = vmatpush2.bf16.msra.mxu0 0
        %1670 = vmatprep.subr.bf16.mxu0 0
        %1671 = vmatpush2.bf16.msra.mxu0 0
        %1672 = vmatprep.subr.bf16.mxu0 0
        %1673 = vmatpush2.bf16.msra.mxu0 0
        %1674 = vmatprep.subr.bf16.mxu0 0
        %1675 = vmatpush2.bf16.msra.mxu0 0
        %1676 = vmatprep.subr.bf16.mxu0 0
        %1677 = vmatpush2.bf16.msra.mxu0 0
        %1678 = vmatprep.subr.bf16.mxu0 0
        %1679 = vmatpush2.bf16.msra.mxu0 0
        %1680 = vmatprep.subr.bf16.mxu0 0
        %1681 = vmatpush2.bf16.msra.mxu0 0
        %1682 = vmatprep.subr.bf16.mxu0 0
        %1683 = vmatpush2.bf16.msra.mxu0 0
        %1684 = vmatprep.mubr.bf16.mxu0 0
        %1685 = vmatmul.mubr.bf16.gmra.mxu0 %v1647
        %v1686 = vpop.f32.mrf.mxu0
        %v1687 = vadd.f32 0.0, %v1686
        %v1688 = vpop.f32.mrf.mxu0
        %v1689 = vpop.f32.mrf.mxu0
        %v1690 = vpop.f32.mrf.mxu0
        %1691 = vdwg.mxu0
        %v1693 = vsel %vm621, %v1639, 0
        %v1696 = vsel %vm684, %v1640, 0
        %1698 = vmatprep.subr.bf16.mxu0 0
        %1699 = vmatpush1.bf16.msra.mxu0 0
        %1700 = vmatprep.subr.bf16.mxu0 0
        %1701 = vmatpush1.bf16.msra.mxu0 0
        %1702 = vmatprep.subr.bf16.mxu0 0
        %1703 = vmatpush1.bf16.msra.mxu0 0
        %1704 = vmatprep.subr.bf16.mxu0 0
        %1705 = vmatpush1.bf16.msra.mxu0 0
        %1706 = vmatprep.subr.bf16.mxu0 0
        %1707 = vmatpush1.bf16.msra.mxu0 0
        %1708 = vmatprep.subr.bf16.mxu0 0
        %1709 = vmatpush1.bf16.msra.mxu0 0
        %1710 = vmatprep.subr.bf16.mxu0 0
        %1711 = vmatpush1.bf16.msra.mxu0 0
        %1712 = vmatprep.subr.bf16.mxu0 0
        %1713 = vmatpush1.bf16.msra.mxu0 %v1696
        %1714 = vmatprep.subr.bf16.mxu0 0
        %1715 = vmatpush2.bf16.msra.mxu0 0
        %1716 = vmatprep.subr.bf16.mxu0 0
        %1717 = vmatpush2.bf16.msra.mxu0 0
        %1718 = vmatprep.subr.bf16.mxu0 0
        %1719 = vmatpush2.bf16.msra.mxu0 0
        %1720 = vmatprep.subr.bf16.mxu0 0
        %1721 = vmatpush2.bf16.msra.mxu0 0
        %1722 = vmatprep.subr.bf16.mxu0 0
        %1723 = vmatpush2.bf16.msra.mxu0 0
        %1724 = vmatprep.subr.bf16.mxu0 0
        %1725 = vmatpush2.bf16.msra.mxu0 0
        %1726 = vmatprep.subr.bf16.mxu0 0
        %1727 = vmatpush2.bf16.msra.mxu0 0
        %1728 = vmatprep.subr.bf16.mxu0 0
        %1729 = vmatpush2.bf16.msra.mxu0 0
        %1730 = vmatprep.mubr.bf16.mxu0 0
        %1731 = vmatmul.mubr.bf16.gmra.mxu0 %v1693
        %v1732 = vpop.f32.mrf.mxu0
        %v1733 = vadd.f32 %v1687, %v1732
        %v1734 = vpop.f32.mrf.mxu0
        %v1735 = vpop.f32.mrf.mxu0
        %v1736 = vpop.f32.mrf.mxu0
        %1737 = vdwg.mxu0
        %s1738 = scalar_lea.vmem [#allocation2], 2
        %v1739 = vld [vmem:[%s1738] ss:$4 sm:$0xff]
        %v1740 = vpack.c.bf16 %v1739, %v1739
        %s1741 = scalar_lea.vmem %s9, 8
        %v1742 = vld [vmem:[%s1741] sm:$0xf]
        %v1744 = vsel %vm621, %v1740, 0
        %v1747 = vsel %vm684, %v1742, 0
        %1749 = vmatprep.subr.bf16.mxu0 0
        %1750 = vmatpush1.bf16.msra.mxu0 0
        %1751 = vmatprep.subr.bf16.mxu0 0
        %1752 = vmatpush1.bf16.msra.mxu0 0
        %1753 = vmatprep.subr.bf16.mxu0 0
        %1754 = vmatpush1.bf16.msra.mxu0 0
        %1755 = vmatprep.subr.bf16.mxu0 0
        %1756 = vmatpush1.bf16.msra.mxu0 0
        %1757 = vmatprep.subr.bf16.mxu0 0
        %1758 = vmatpush1.bf16.msra.mxu0 0
        %1759 = vmatprep.subr.bf16.mxu0 0
        %1760 = vmatpush1.bf16.msra.mxu0 0
        %1761 = vmatprep.subr.bf16.mxu0 0
        %1762 = vmatpush1.bf16.msra.mxu0 0
        %1763 = vmatprep.subr.bf16.mxu0 0
        %1764 = vmatpush1.bf16.msra.mxu0 %v1747
        %1765 = vmatprep.subr.bf16.mxu0 0
        %1766 = vmatpush2.bf16.msra.mxu0 0
        %1767 = vmatprep.subr.bf16.mxu0 0
        %1768 = vmatpush2.bf16.msra.mxu0 0
        %1769 = vmatprep.subr.bf16.mxu0 0
        %1770 = vmatpush2.bf16.msra.mxu0 0
        %1771 = vmatprep.subr.bf16.mxu0 0
        %1772 = vmatpush2.bf16.msra.mxu0 0
        %1773 = vmatprep.subr.bf16.mxu0 0
        %1774 = vmatpush2.bf16.msra.mxu0 0
        %1775 = vmatprep.subr.bf16.mxu0 0
        %1776 = vmatpush2.bf16.msra.mxu0 0
        %1777 = vmatprep.subr.bf16.mxu0 0
        %1778 = vmatpush2.bf16.msra.mxu0 0
        %1779 = vmatprep.subr.bf16.mxu0 0
        %1780 = vmatpush2.bf16.msra.mxu0 0
        %1781 = vmatprep.mubr.bf16.mxu0 0
        %1782 = vmatmul.mubr.bf16.gmra.mxu0 %v1744
        %v1783 = vpop.f32.mrf.mxu0
        %v1784 = vadd.f32 0.0, %v1783
        %v1785 = vpop.f32.mrf.mxu0
        %v1786 = vpop.f32.mrf.mxu0
        %v1787 = vpop.f32.mrf.mxu0
        %1788 = vdwg.mxu0
        %v1789 = vadd.f32 %v1733, %v1784
        %s1790 = scalar_lea.vmem [#allocation2], 3
        %v1791 = vld [vmem:[%s1790] ss:$4 sm:$0xff]
        %v1792 = vpack.c.bf16 %v1791, %v1791
        %s1793 = scalar_lea.vmem %s9, 12
        %v1794 = vld [vmem:[%s1793] sm:$0xf]
        %v1796 = vsel %vm621, %v1792, 0
        %v1799 = vsel %vm684, %v1794, 0
        %1801 = vmatprep.subr.bf16.mxu0 0
        %1802 = vmatpush1.bf16.msra.mxu0 0
        %1803 = vmatprep.subr.bf16.mxu0 0
        %1804 = vmatpush1.bf16.msra.mxu0 0
        %1805 = vmatprep.subr.bf16.mxu0 0
        %1806 = vmatpush1.bf16.msra.mxu0 0
        %1807 = vmatprep.subr.bf16.mxu0 0
        %1808 = vmatpush1.bf16.msra.mxu0 0
        %1809 = vmatprep.subr.bf16.mxu0 0
        %1810 = vmatpush1.bf16.msra.mxu0 0
        %1811 = vmatprep.subr.bf16.mxu0 0
        %1812 = vmatpush1.bf16.msra.mxu0 0
        %1813 = vmatprep.subr.bf16.mxu0 0
        %1814 = vmatpush1.bf16.msra.mxu0 0
        %1815 = vmatprep.subr.bf16.mxu0 0
        %1816 = vmatpush1.bf16.msra.mxu0 %v1799
        %1817 = vmatprep.subr.bf16.mxu0 0
        %1818 = vmatpush2.bf16.msra.mxu0 0
        %1819 = vmatprep.subr.bf16.mxu0 0
        %1820 = vmatpush2.bf16.msra.mxu0 0
        %1821 = vmatprep.subr.bf16.mxu0 0
        %1822 = vmatpush2.bf16.msra.mxu0 0
        %1823 = vmatprep.subr.bf16.mxu0 0
        %1824 = vmatpush2.bf16.msra.mxu0 0
        %1825 = vmatprep.subr.bf16.mxu0 0
        %1826 = vmatpush2.bf16.msra.mxu0 0
        %1827 = vmatprep.subr.bf16.mxu0 0
        %1828 = vmatpush2.bf16.msra.mxu0 0
        %1829 = vmatprep.subr.bf16.mxu0 0
        %1830 = vmatpush2.bf16.msra.mxu0 0
        %1831 = vmatprep.subr.bf16.mxu0 0
        %1832 = vmatpush2.bf16.msra.mxu0 0
        %1833 = vmatprep.mubr.bf16.mxu0 0
        %1834 = vmatmul.mubr.bf16.gmra.mxu0 %v1796
        %v1835 = vpop.f32.mrf.mxu0
        %v1836 = vadd.f32 0.0, %v1835
        %v1837 = vpop.f32.mrf.mxu0
        %v1838 = vpop.f32.mrf.mxu0
        %v1839 = vpop.f32.mrf.mxu0
        %1840 = vdwg.mxu0
        %v1841 = vadd.f32 %v1789, %v1836
        %v1842 = vld [vmem:[%s10] sm:$0x1]
        %v1844 = vlaneseq
        %v1845 = vshrl.u32 %v1844, 7
        %v1846 = vsub.s32 0, %v1845
        %v1847 = vrot.slane %v1842, %v1846
        %v1849 = vadd.f32 %v1841, %v1847
        %1850 = vst.msk [vmem:[%s403] sm:$0xff] %vm443, %v1849
        %s1851 = sand.u32 %s279, 1
        %s1852 = scalar_lea.sflag [#allocation4], %s1851
        %s1853 = sand.u32 %s279, 1
        %s1854 = smul.addr %s1853, 8
        %s1855 = scalar_lea.vmem [#allocation3], %s1854
        // Predicated region
        $region65: #{tpu_custom_call.1} parent=63 // pred_check
          %p1856 = pneg %p289
        $region66: #{tpu_custom_call.1} parent=63 // pred_check_branch
          %1858 = sbr.rel (%p1856) target = $region68
        $region67: #{tpu_custom_call.1} parent=63 // pred_region
          %s1860 = ssub.s32 128, 128
          %1861 = vsyncadd %s1852, %s1860
          %s1862 = smul.addr %s25, 128
          %s1863 = scalar_lea.hbm %s11, %s1862
          %s1865 = sshll.u32 %s1855, 4
          %s1866 = int_to_ptr.vmem [resolvable:$true] %s1865
          %1868 = dma.vmem_to_hbm [thread:$0]  %s1866, 128, %s1863, %s1852
        $region68: #{tpu_custom_call.1} parent=63 // pred_fallthru
          _
      $region64: #{tpu_custom_call.1} parent=5 // pred_fallthru
        _
      %p1869 = scmp.le.s32.totalorder 2, %s20
      // Predicated region
      $region69: #{tpu_custom_call.1} parent=5 // pred_check
        %p1870 = pneg %p1869
      $region70: #{tpu_custom_call.1} parent=5 // pred_check_branch
        %1872 = sbr.rel (%p1870) target = $region72
      $region71: #{tpu_custom_call.1} parent=5 // pred_region
        %s1873 = ssub.s32 %s20, 2
        // Predicated region
        $region73: #{tpu_custom_call.1} parent=71 // pred_check
          %p1874 = pneg %p295
        $region74: #{tpu_custom_call.1} parent=71 // pred_check_branch
          %1876 = sbr.rel (%p1874) target = $region76
        $region75: #{tpu_custom_call.1} parent=71 // pred_region
          %s1877 = sand.u32 %s280, 1
          %s1878 = scalar_lea.sflag [#allocation4], %s1877
          %s1879 = sand.u32 %s280, 1
          %s1880 = smul.addr %s1879, 8
          %s1881 = scalar_lea.vmem [#allocation3], %s1880
          %1882 = dma.done %s1878, 128
        $region76: #{tpu_custom_call.1} parent=71 // pred_fallthru
          _
      $region72: #{tpu_custom_call.1} parent=5 // pred_fallthru
        _
    $region6: #{tpu_custom_call.1} parent=1 // loop_footer
      %s24 = sadd.s32 1, %s20
    $region7: #{tpu_custom_call.1} parent=1 // loop_footer_branch
      %19 = sbr.rel target = $region3
    $region8: #{tpu_custom_call.1} parent=1 // loop_exit
      _
    %1883 = vsyncpa [#allocation4], 1
    %s1884 = scalar_lea.sflag [#allocation4], 1
    %1885 = vsyncpa %s1884, 1

</llo_original>
